<compile_context>
chip_gen: v7x
topology: tpu7x:2x2x1
jax: 0.10.0
libtpu: 0.0.40
codegen_flags: <defaults>
</compile_context>

<pallas_src>
import functools
import math

import jax
import jax.numpy as jnp
from jax.experimental import pallas as pl
from jax.experimental.pallas import tpu as pltpu


# TODO(synk): PyTorch nn.GELU / HF AST uses exact erf GELU; tanh-approx is used here for
# Mosaic-safe lowering (numeric diff ~1e-3).
def _gelu(x):
    return jax.nn.gelu(x, approximate=True)


# Tile preferences: second-to-last (sublane) dims must be multiples of 8, last (lane)
# dims multiples of 128, unless the block covers the full array dim.
_M_TILES = (512, 256, 128, 64, 32, 16, 8)
_N_TILES = (512, 384, 256, 128)
_VMEM_LIMIT = 32 * 1024 * 1024  # safe on v5e (128 MiB phys), v6e (128), v7x (64)


def _pick_tile(dim, prefs):
    """Largest preferred tile that evenly divides `dim`; otherwise the full dim."""
    for t in prefs:
        if t <= dim and dim % t == 0:
            return t
    return dim


def _cp(*sem):
    return pltpu.CompilerParams(dimension_semantics=tuple(sem),
                                vmem_limit_bytes=_VMEM_LIMIT)


# ----------------------------- Pallas kernels -----------------------------

def _linear_kernel(x_ref, w_ref, b_ref, o_ref, *, act):
    y = jnp.dot(x_ref[...].astype(jnp.bfloat16), w_ref[...],
                preferred_element_type=jnp.float32) + b_ref[...]
    if act == "gelu":
        y = _gelu(y)
    o_ref[...] = y.astype(o_ref.dtype)


def linear(x, w, b, act=None):
    """y = x @ w + b (+ optional GELU).  x:(M,K) f32, w:(K,N) bf16, b:(N,) f32."""
    M, K = x.shape
    N = w.shape[1]
    tm = _pick_tile(M, _M_TILES)
    tn = _pick_tile(N, _N_TILES)
    return pl.pallas_call(
        functools.partial(_linear_kernel, act=act),
        out_shape=jax.ShapeDtypeStruct((M, N), jnp.float32),
        grid=(M // tm, N // tn),
        in_specs=[
            pl.BlockSpec((tm, K), lambda i, j: (i, 0)),
            pl.BlockSpec((K, tn), lambda i, j: (0, j)),
            pl.BlockSpec((1, tn), lambda i, j: (0, j)),
        ],
        out_specs=pl.BlockSpec((tm, tn), lambda i, j: (i, j)),
        compiler_params=_cp("parallel", "parallel"),
    )(x, w, b.reshape(1, N))


def _ln_matmul_kernel(x_ref, g_ref, beta_ref, w_ref, b_ref, o_ref, *, eps, act):
    # LayerNorm fused as a matmul prologue (pure VPU/EUP work hidden under the MXU).
    x = x_ref[...].astype(jnp.float32)
    mu = jnp.mean(x, axis=-1, keepdims=True)
    xc = x - mu
    var = jnp.mean(xc * xc, axis=-1, keepdims=True)
    xn = xc * jax.lax.rsqrt(var + eps) * g_ref[...] + beta_ref[...]
    y = jnp.dot(xn.astype(jnp.bfloat16), w_ref[...],
                preferred_element_type=jnp.float32) + b_ref[...]
    if act == "gelu":
        y = _gelu(y)
    o_ref[...] = y.astype(o_ref.dtype)


def ln_matmul(x, g, beta, w, b, act=None, eps=1e-12):
    """y = LayerNorm(x) @ w + b (+ optional GELU).  K stays resident (LN needs rows)."""
    M, K = x.shape
    N = w.shape[1]
    tm = _pick_tile(M, _M_TILES)
    tn = _pick_tile(N, _N_TILES)
    return pl.pallas_call(
        functools.partial(_ln_matmul_kernel, eps=eps, act=act),
        out_shape=jax.ShapeDtypeStruct((M, N), jnp.float32),
        grid=(M // tm, N // tn),
        in_specs=[
            pl.BlockSpec((tm, K), lambda i, j: (i, 0)),
            pl.BlockSpec((1, K), lambda i, j: (0, 0)),
            pl.BlockSpec((1, K), lambda i, j: (0, 0)),
            pl.BlockSpec((K, tn), lambda i, j: (0, j)),
            pl.BlockSpec((1, tn), lambda i, j: (0, j)),
        ],
        out_specs=pl.BlockSpec((tm, tn), lambda i, j: (i, j)),
        compiler_params=_cp("parallel", "parallel"),
    )(x, g.reshape(1, K), beta.reshape(1, K), w, b.reshape(1, N))


def _attention_out_kernel(qkv_ref, wo_ref, bo_ref, res_ref, o_ref, *, num_heads, scale):
    # Full attention block for one batch element: per-head softmax(QK^T)V, head concat,
    # ASTSelfOutput dense projection, and the attention residual add — all fused.
    qkv = qkv_ref[0]                                   # (S, 3H) f32
    H = qkv.shape[-1] // 3
    Dh = H // num_heads
    heads = []
    for h in range(num_heads):                         # static loop, static slices
        q = (qkv[:, h * Dh:(h + 1) * Dh] * scale).astype(jnp.bfloat16)
        k = qkv[:, H + h * Dh:H + (h + 1) * Dh].astype(jnp.bfloat16)
        v = qkv[:, 2 * H + h * Dh:2 * H + (h + 1) * Dh].astype(jnp.bfloat16)
        s = jax.lax.dot_general(q, k, (((1,), (1,)), ((), ())),
                                preferred_element_type=jnp.float32)
        m = jnp.max(s, axis=-1, keepdims=True)
        p = jnp.exp(s - m)
        p = p * pl.reciprocal(jnp.sum(p, axis=-1, keepdims=True), approx=True)
        heads.append(jnp.dot(p.astype(jnp.bfloat16), v,
                             preferred_element_type=jnp.float32))
    ctx = jnp.concatenate(heads, axis=-1)              # (S, H) lane-dense context
    y = jnp.dot(ctx.astype(jnp.bfloat16), wo_ref[...],
                preferred_element_type=jnp.float32) + bo_ref[...]
    o_ref[...] = (y + res_ref[0].astype(jnp.float32))[None].astype(o_ref.dtype)


def attention_out(qkv, wo, bo, residual, num_heads):
    """qkv: (B, S, 3H) fused QKV -> attention + output dense + residual -> (B, S, H)."""
    B, S, H3 = qkv.shape
    H = H3 // 3
    scale = 1.0 / math.sqrt(H // num_heads)
    # TODO(synk): at real AST scale (S~1214) the per-head (S,S) score matrix should be
    # KV-tiled with an online-softmax accumulator (flash-style) instead of full-S.
    return pl.pallas_call(
        functools.partial(_attention_out_kernel, num_heads=num_heads, scale=scale),
        out_shape=jax.ShapeDtypeStruct((B, S, H), jnp.float32),
        grid=(B,),
        in_specs=[
            pl.BlockSpec((1, S, H3), lambda b: (b, 0, 0)),
            pl.BlockSpec((H, H), lambda b: (0, 0)),
            pl.BlockSpec((1, H), lambda b: (0, 0)),
            pl.BlockSpec((1, S, H), lambda b: (b, 0, 0)),
        ],
        out_specs=pl.BlockSpec((1, S, H), lambda b: (b, 0, 0)),
        compiler_params=_cp("parallel"),
    )(qkv, wo, bo.reshape(1, H), residual)


def _ffn_adapter_kernel(inter_ref, wo2_ref, bo2_ref, wd_ref, bd_ref, wu_ref, bu_ref,
                        res_ref, o_ref, *, apply_residual):
    # Fused: ffn = inter @ wo2 + bo2 ; adapter(ffn) = up(GELU(down(ffn)));
    #        out = adapter(ffn) + hidden_states [+ ffn if APPLY_RESIDUAL]
    ffn = jnp.dot(inter_ref[...].astype(jnp.bfloat16), wo2_ref[...],
                  preferred_element_type=jnp.float32) + bo2_ref[...]
    d = jnp.dot(ffn.astype(jnp.bfloat16), wd_ref[...],
                preferred_element_type=jnp.float32) + bd_ref[...]
    d = _gelu(d)
    u = jnp.dot(d.astype(jnp.bfloat16), wu_ref[...],
                preferred_element_type=jnp.float32) + bu_ref[...]
    out = u + res_ref[...].astype(jnp.float32)
    if apply_residual:
        out = out + ffn
    o_ref[...] = out.astype(o_ref.dtype)


def ffn_out_adapter(inter, wo2, bo2, wd, bd, wu, bu, residual, apply_residual=True):
    """Tiled over M only; all (small) weights stay resident across grid steps."""
    M, I = inter.shape
    H = wo2.shape[1]
    Bn = wd.shape[1]
    tm = _pick_tile(M, _M_TILES)
    return pl.pallas_call(
        functools.partial(_ffn_adapter_kernel, apply_residual=apply_residual),
        out_shape=jax.ShapeDtypeStruct((M, H), jnp.float32),
        grid=(M // tm,),
        in_specs=[
            pl.BlockSpec((tm, I), lambda i: (i, 0)),
            pl.BlockSpec((I, H), lambda i: (0, 0)),
            pl.BlockSpec((1, H), lambda i: (0, 0)),
            pl.BlockSpec((H, Bn), lambda i: (0, 0)),
            pl.BlockSpec((1, Bn), lambda i: (0, 0)),
            pl.BlockSpec((Bn, H), lambda i: (0, 0)),
            pl.BlockSpec((1, H), lambda i: (0, 0)),
            pl.BlockSpec((tm, H), lambda i: (i, 0)),
        ],
        out_specs=pl.BlockSpec((tm, H), lambda i: (i, 0)),
        compiler_params=_cp("parallel"),
    )(inter, wo2, bo2.reshape(1, H), wd, bd.reshape(1, Bn), wu, bu.reshape(1, H),
      residual)


# ----------------------------- Model wiring (glue) -----------------------------

def ast_layer_forward(hidden, p, cfg):
    """ASTLayer_adapter forward: Pfeiffer + sequential + bottleneck adapter."""
    B, S, H = hidden.shape
    h2 = hidden.reshape(B * S, H)

    # --- self attention (pre-LN); LN fused into the fused QKV projection, and the
    #     ASTSelfOutput dense + attention residual fused into the attention kernel ---
    qkv = ln_matmul(h2, p["ln1_g"], p["ln1_b"], p["w_qkv"], p["b_qkv"])   # (B*S, 3H)
    hidden2 = attention_out(qkv.reshape(B, S, 3 * H), p["wo"], p["bo"],
                            hidden, cfg["heads"])                          # (B, S, H)
    h2b = hidden2.reshape(B * S, H)

    # --- FFN + sequential bottleneck adapter ---
    inter = ln_matmul(h2b, p["ln2_g"], p["ln2_b"], p["wi"], p["bi"],
                      act="gelu")                                          # ASTIntermediate
    out = ffn_out_adapter(inter, p["wo2"], p["bo2"],
                          p["ad_wd"], p["ad_bd"], p["ad_wu"], p["ad_bu"],
                          h2b, apply_residual=cfg["apply_residual"])
    return out.reshape(B, S, H)


def ast_adapter_forward(x_spec, params, cfg):
    B, T, F = x_spec.shape
    H = cfg["hidden"]
    KH = KW = 16
    STRIDE = 10

    # ASTPatchEmbeddings: (B,T,F) -> unsqueeze(1) -> transpose(2,3) -> (B,1,F,T) conv.
    spec = jnp.transpose(x_spec, (0, 2, 1))[:, None]                      # (B,1,F,T)
    patches = jax.lax.conv_general_dilated_patches(
        spec, filter_shape=(KH, KW), window_strides=(STRIDE, STRIDE),
        padding="VALID", dimension_numbers=("NCHW", "OIHW", "NCHW"))      # (B,256,Fp,Tp)
    _, C, Fp, Tp = patches.shape
    P = Fp * Tp
    patches = patches.transpose(0, 2, 3, 1).reshape(B * P, C)             # conv flatten order

    proj = linear(patches, params["patch_w"], params["patch_b"]).reshape(B, P, H)

    cls = jnp.broadcast_to(params["cls_token"], (B, 1, H))
    dist = jnp.broadcast_to(params["dist_token"], (B, 1, H))
    hidden = jnp.concatenate([cls, dist, proj], axis=1) + params["pos_emb"]
    S = P + 2

    for p in params["layers"]:
        hidden = ast_layer_forward(hidden, p, cfg)

    # Final LayerNorm fused with the classification head (head is affine, so for 'ALL'
    # mean(head(LN(tok))) == head(mean(LN(tok)))).
    if cfg["final_output"] == "CLS":
        logits = ln_matmul(hidden[:, 0], params["ln_f_g"], params["ln_f_b"],
                           params["head_w"], params["head_b"])
    else:
        tok = ln_matmul(hidden.reshape(B * S, H), params["ln_f_g"], params["ln_f_b"],
                        params["head_w"], params["head_b"])
        logits = tok.reshape(B, S, -1).mean(axis=1)
    return logits


# ----------------------------- Deterministic params -----------------------------

def init_params(key, cfg, seq_len):
    H, I, Bn = cfg["hidden"], cfg["intermediate"], cfg["bottleneck"]
    NC, nL = cfg["num_classes"], cfg["layers"]
    PATCH = 16 * 16
    keys = jax.random.split(key, 8 + nL)

    def dense(k, fan_in, fan_out, scale=0.02):
        kw, kb = jax.random.split(k)
        w = (scale * jax.random.normal(kw, (fan_in, fan_out), jnp.float32)).astype(jnp.bfloat16)
        b = scale * jax.random.normal(kb, (fan_out,), jnp.float32)
        return w, b

    patch_w, patch_b = dense(keys[0], PATCH, H)
    head_w, head_b = dense(keys[4], H, NC)
    params = dict(
        patch_w=patch_w, patch_b=patch_b,
        cls_token=0.02 * jax.random.normal(keys[1], (1, 1, H), jnp.float32),
        dist_token=0.02 * jax.random.normal(keys[2], (1, 1, H), jnp.float32),
        pos_emb=0.02 * jax.random.normal(keys[3], (1, seq_len, H), jnp.float32),
        ln_f_g=jnp.ones((H,), jnp.float32), ln_f_b=jnp.zeros((H,), jnp.float32),
        head_w=head_w, head_b=head_b, layers=[],
    )
    for li in range(nL):
        lk = jax.random.split(keys[8 + li], 8)
        wq, bq = dense(lk[0], H, H)
        wk, bk = dense(lk[1], H, H)
        wv, bv = dense(lk[2], H, H)
        wo, bo = dense(lk[3], H, H)
        wi, bi = dense(lk[4], H, I)
        wo2, bo2 = dense(lk[5], I, H)
        params["layers"].append(dict(
            ln1_g=jnp.ones((H,), jnp.float32), ln1_b=jnp.zeros((H,), jnp.float32),
            ln2_g=jnp.ones((H,), jnp.float32), ln2_b=jnp.zeros((H,), jnp.float32),
            # Fused QKV projection weight (H, 3H) and bias (3H,)
            w_qkv=jnp.concatenate([wq, wk, wv], axis=1),
            b_qkv=jnp.concatenate([bq, bk, bv], axis=0),
            wo=wo, bo=bo, wi=wi, bi=bi, wo2=wo2, bo2=bo2,
            # Bottleneck_adapter uses nn.init.zeros_ on weights and biases.
            ad_wd=jnp.zeros((H, Bn), jnp.bfloat16), ad_bd=jnp.zeros((Bn,), jnp.float32),
            ad_wu=jnp.zeros((Bn, H), jnp.bfloat16), ad_bu=jnp.zeros((H,), jnp.float32),
        ))
    return params


if __name__ == "__main__":
    # small synthetic AST: hidden=32, 4 heads, 2 layers, intermediate=64, bottleneck=8
    B, T, F = 2, 36, 36  # x: (batch, max_length, num_mel_bins)
    cfg = dict(hidden=32, heads=4, intermediate=64, layers=2,
               bottleneck=8,  # reduction_rate=4 -> round(32/4)=8
               num_classes=5, final_output="CLS", apply_residual=True)

    key = jax.random.PRNGKey(0)
    kx, kp = jax.random.split(key)
    x = jax.random.normal(kx, (B, T, F), jnp.float32)

    Fp = (F - 16) // 10 + 1
    Tp = (T - 16) // 10 + 1
    seq_len = Fp * Tp + 2  # +cls +distillation tokens
    params = init_params(kp, cfg, seq_len)

    fwd = jax.jit(functools.partial(ast_adapter_forward, cfg=cfg))
    out = fwd(x, params)
    out = jax.block_until_ready(out)
    assert out.shape == (B, cfg["num_classes"]) and out.dtype == jnp.float32
    print("KERNEL_OK")
</pallas_src>

<mosaic_0001>
module attributes {stable_mosaic.version = 11 : i64} {
  func.func @_linear_kernel(%arg0: i32, %arg1: i32, %arg2: memref<18x256xf32, #tpu.memory_space<vmem>>, %arg3: memref<256x32xbf16, #tpu.memory_space<vmem>>, %arg4: memref<1x32xf32, #tpu.memory_space<vmem>>, %arg5: memref<18x32xf32, #tpu.memory_space<vmem>>) attributes {dimension_semantics = [#tpu.dimension_semantics<parallel>, #tpu.dimension_semantics<parallel>], iteration_bounds = array<i64: 1, 1>, scalar_prefetch = 0 : i64, scratch_operands = 0 : i64, tpu.core_type = #tpu.core_type<tc>, window_params = [{transform_indices = @transform_0, window_bounds = array<i64: 18, 256>}, {transform_indices = @transform_1, window_bounds = array<i64: 256, 32>}, {transform_indices = @transform_2, window_bounds = array<i64: 1, 32>}, {transform_indices = @transform_3, window_bounds = array<i64: 18, 32>}]} {
    %c0 = arith.constant 0 : index
    %c0_0 = arith.constant 0 : index
    %0 = vector.load %arg2[%c0, %c0_0] : memref<18x256xf32, #tpu.memory_space<vmem>>, vector<18x256xf32>
    %1 = arith.truncf %0 : vector<18x256xf32> to vector<18x256xbf16>
    %c0_1 = arith.constant 0 : index
    %c0_2 = arith.constant 0 : index
    %2 = vector.load %arg3[%c0_1, %c0_2] : memref<256x32xbf16, #tpu.memory_space<vmem>>, vector<256x32xbf16>
    %cst = arith.constant dense<0.000000e+00> : vector<18x32xf32>
    %3 = tpu.matmul %1, %2, %cst {dimension_numbers = #tpu.dot_dimension_numbers<[1], [0], [0], [1], [0, 0, 1, 1], [], []>} : vector<18x256xbf16>, vector<256x32xbf16>, vector<18x32xf32> -> vector<18x32xf32>
    %c0_3 = arith.constant 0 : index
    %c0_4 = arith.constant 0 : index
    %4 = vector.load %arg4[%c0_3, %c0_4] : memref<1x32xf32, #tpu.memory_space<vmem>>, vector<1x32xf32>
    %5 = vector.broadcast %4 : vector<1x32xf32> to vector<18x32xf32>
    %6 = arith.addf %3, %5 : vector<18x32xf32>
    %c0_5 = arith.constant 0 : index
    %c0_6 = arith.constant 0 : index
    %7 = vector.load %arg5[%c0_5, %c0_6] : memref<18x32xf32, #tpu.memory_space<vmem>>, vector<18x32xf32>
    tpu.vector_store %arg5[%c0_5, %c0_6], %6 {strides = array<i32>} : memref<18x32xf32, #tpu.memory_space<vmem>>, vector<18x32xf32>,
    return
  }
  func.func @transform_0(%arg0: i32, %arg1: i32) -> (i32, i32) {
    %c0_i32 = arith.constant 0 : i32
    %c0_i32_0 = arith.constant 0 : i32
    return %arg0, %c0_i32 : i32, i32
  }
  func.func @transform_1(%arg0: i32, %arg1: i32) -> (i32, i32) {
    %c0_i32 = arith.constant 0 : i32
    %c0_i32_0 = arith.constant 0 : i32
    return %c0_i32, %arg1 : i32, i32
  }
  func.func @transform_2(%arg0: i32, %arg1: i32) -> (i32, i32) {
    %c0_i32 = arith.constant 0 : i32
    %c0_i32_0 = arith.constant 0 : i32
    return %c0_i32, %arg1 : i32, i32
  }
  func.func @transform_3(%arg0: i32, %arg1: i32) -> (i32, i32) {
    %c0_i32 = arith.constant 0 : i32
    return %arg0, %arg1 : i32, i32
  }
}

module attributes {stable_mosaic.version = 11 : i64} {
  func.func @_ln_matmul_kernel(%arg0: i32, %arg1: i32, %arg2: memref<22x32xf32, #tpu.memory_space<vmem>>, %arg3: memref<1x32xf32, #tpu.memory_space<vmem>>, %arg4: memref<1x32xf32, #tpu.memory_space<vmem>>, %arg5: memref<32x96xbf16, #tpu.memory_space<vmem>>, %arg6: memref<1x96xf32, #tpu.memory_space<vmem>>, %arg7: memref<22x96xf32, #tpu.memory_space<vmem>>) attributes {dimension_semantics = [#tpu.dimension_semantics<parallel>, #tpu.dimension_semantics<parallel>], iteration_bounds = array<i64: 1, 1>, scalar_prefetch = 0 : i64, scratch_operands = 0 : i64, tpu.core_type = #tpu.core_type<tc>, window_params = [{transform_indices = @transform_0, window_bounds = array<i64: 22, 32>}, {pipeline_mode = #tpu.pipeline_mode<synchronous>, transform_indices = @transform_1, window_bounds = array<i64: 1, 32>}, {pipeline_mode = #tpu.pipeline_mode<synchronous>, transform_indices = @transform_2, window_bounds = array<i64: 1, 32>}, {transform_indices = @transform_3, window_bounds = array<i64: 32, 96>}, {transform_indices = @transform_4, window_bounds = array<i64: 1, 96>}, {transform_indices = @transform_5, window_bounds = array<i64: 22, 96>}]} {
    %c0 = arith.constant 0 : index
    %c0_0 = arith.constant 0 : index
    %0 = vector.load %arg2[%c0, %c0_0] : memref<22x32xf32, #tpu.memory_space<vmem>>, vector<22x32xf32>
    %cst = arith.constant dense<0.000000e+00> : vector<22xf32>
    %1 = vector.multi_reduction <add>, %0, %cst [1] : vector<22x32xf32> to vector<22xf32>
    %2 = vector.shape_cast %1 : vector<22xf32> to vector<22x1xf32>
    %cst_1 = arith.constant 3.200000e+01 : f32
    %3 = vector.broadcast %cst_1 : f32 to vector<22x1xf32>
    %4 = arith.divf %2, %3 : vector<22x1xf32>
    %5 = vector.broadcast %4 : vector<22x1xf32> to vector<22x32xf32>
    %6 = arith.subf %0, %5 : vector<22x32xf32>
    %7 = arith.mulf %6, %6 : vector<22x32xf32>
    %cst_2 = arith.constant dense<0.000000e+00> : vector<22xf32>
    %8 = vector.multi_reduction <add>, %7, %cst_2 [1] : vector<22x32xf32> to vector<22xf32>
    %9 = vector.shape_cast %8 : vector<22xf32> to vector<22x1xf32>
    %cst_3 = arith.constant 3.200000e+01 : f32
    %10 = vector.broadcast %cst_3 : f32 to vector<22x1xf32>
    %11 = arith.divf %9, %10 : vector<22x1xf32>
    %cst_4 = arith.constant 9.99999996E-13 : f32
    %12 = vector.broadcast %cst_4 : f32 to vector<22x1xf32>
    %13 = arith.addf %11, %12 : vector<22x1xf32>
    %14 = math.rsqrt %13 : vector<22x1xf32>
    %15 = vector.broadcast %14 : vector<22x1xf32> to vector<22x32xf32>
    %16 = arith.mulf %6, %15 : vector<22x32xf32>
    %c0_5 = arith.constant 0 : index
    %c0_6 = arith.constant 0 : index
    %17 = vector.load %arg3[%c0_5, %c0_6] : memref<1x32xf32, #tpu.memory_space<vmem>>, vector<1x32xf32>
    %18 = vector.broadcast %17 : vector<1x32xf32> to vector<22x32xf32>
    %19 = arith.mulf %16, %18 : vector<22x32xf32>
    %c0_7 = arith.constant 0 : index
    %c0_8 = arith.constant 0 : index
    %20 = vector.load %arg4[%c0_7, %c0_8] : memref<1x32xf32, #tpu.memory_space<vmem>>, vector<1x32xf32>
    %21 = vector.broadcast %20 : vector<1x32xf32> to vector<22x32xf32>
    %22 = arith.addf %19, %21 : vector<22x32xf32>
    %23 = arith.truncf %22 : vector<22x32xf32> to vector<22x32xbf16>
    %c0_9 = arith.constant 0 : index
    %c0_10 = arith.constant 0 : index
    %24 = vector.load %arg5[%c0_9, %c0_10] : memref<32x96xbf16, #tpu.memory_space<vmem>>, vector<32x96xbf16>
    %cst_11 = arith.constant dense<0.000000e+00> : vector<22x96xf32>
    %25 = tpu.matmul %23, %24, %cst_11 {dimension_numbers = #tpu.dot_dimension_numbers<[1], [0], [0], [1], [0, 0, 1, 1], [], []>} : vector<22x32xbf16>, vector<32x96xbf16>, vector<22x96xf32> -> vector<22x96xf32>
    %c0_12 = arith.constant 0 : index
    %c0_13 = arith.constant 0 : index
    %26 = vector.load %arg6[%c0_12, %c0_13] : memref<1x96xf32, #tpu.memory_space<vmem>>, vector<1x96xf32>
    %27 = vector.broadcast %26 : vector<1x96xf32> to vector<22x96xf32>
    %28 = arith.addf %25, %27 : vector<22x96xf32>
    %c0_14 = arith.constant 0 : index
    %c0_15 = arith.constant 0 : index
    %29 = vector.load %arg7[%c0_14, %c0_15] : memref<22x96xf32, #tpu.memory_space<vmem>>, vector<22x96xf32>
    tpu.vector_store %arg7[%c0_14, %c0_15], %28 {strides = array<i32>} : memref<22x96xf32, #tpu.memory_space<vmem>>, vector<22x96xf32>,
    return
  }
  func.func @transform_0(%arg0: i32, %arg1: i32) -> (i32, i32) {
    %c0_i32 = arith.constant 0 : i32
    %c0_i32_0 = arith.constant 0 : i32
    return %arg0, %c0_i32 : i32, i32
  }
  func.func @transform_1(%arg0: i32, %arg1: i32) -> (i32, i32) {
    %c0_i32 = arith.constant 0 : i32
    %c0_i32_0 = arith.constant 0 : i32
    %c0_i32_1 = arith.constant 0 : i32
    return %c0_i32, %c0_i32_0 : i32, i32
  }
  func.func @transform_2(%arg0: i32, %arg1: i32) -> (i32, i32) {
    %c0_i32 = arith.constant 0 : i32
    %c0_i32_0 = arith.constant 0 : i32
    %c0_i32_1 = arith.constant 0 : i32
    return %c0_i32, %c0_i32_0 : i32, i32
  }
  func.func @transform_3(%arg0: i32, %arg1: i32) -> (i32, i32) {
    %c0_i32 = arith.constant 0 : i32
    %c0_i32_0 = arith.constant 0 : i32
    return %c0_i32, %arg1 : i32, i32
  }
  func.func @transform_4(%arg0: i32, %arg1: i32) -> (i32, i32) {
    %c0_i32 = arith.constant 0 : i32
    %c0_i32_0 = arith.constant 0 : i32
    return %c0_i32, %arg1 : i32, i32
  }
  func.func @transform_5(%arg0: i32, %arg1: i32) -> (i32, i32) {
    %c0_i32 = arith.constant 0 : i32
    return %arg0, %arg1 : i32, i32
  }
}

module attributes {stable_mosaic.version = 11 : i64} {
  func.func @_ln_matmul_kernel(%arg0: i32, %arg1: i32, %arg2: memref<22x32xf32, #tpu.memory_space<vmem>>, %arg3: memref<1x32xf32, #tpu.memory_space<vmem>>, %arg4: memref<1x32xf32, #tpu.memory_space<vmem>>, %arg5: memref<32x64xbf16, #tpu.memory_space<vmem>>, %arg6: memref<1x64xf32, #tpu.memory_space<vmem>>, %arg7: memref<22x64xf32, #tpu.memory_space<vmem>>) attributes {dimension_semantics = [#tpu.dimension_semantics<parallel>, #tpu.dimension_semantics<parallel>], iteration_bounds = array<i64: 1, 1>, scalar_prefetch = 0 : i64, scratch_operands = 0 : i64, tpu.core_type = #tpu.core_type<tc>, window_params = [{transform_indices = @transform_0, window_bounds = array<i64: 22, 32>}, {pipeline_mode = #tpu.pipeline_mode<synchronous>, transform_indices = @transform_1, window_bounds = array<i64: 1, 32>}, {pipeline_mode = #tpu.pipeline_mode<synchronous>, transform_indices = @transform_2, window_bounds = array<i64: 1, 32>}, {transform_indices = @transform_3, window_bounds = array<i64: 32, 64>}, {transform_indices = @transform_4, window_bounds = array<i64: 1, 64>}, {transform_indices = @transform_5, window_bounds = array<i64: 22, 64>}]} {
    %c0 = arith.constant 0 : index
    %c0_0 = arith.constant 0 : index
    %0 = vector.load %arg2[%c0, %c0_0] : memref<22x32xf32, #tpu.memory_space<vmem>>, vector<22x32xf32>
    %cst = arith.constant dense<0.000000e+00> : vector<22xf32>
    %1 = vector.multi_reduction <add>, %0, %cst [1] : vector<22x32xf32> to vector<22xf32>
    %2 = vector.shape_cast %1 : vector<22xf32> to vector<22x1xf32>
    %cst_1 = arith.constant 3.200000e+01 : f32
    %3 = vector.broadcast %cst_1 : f32 to vector<22x1xf32>
    %4 = arith.divf %2, %3 : vector<22x1xf32>
    %5 = vector.broadcast %4 : vector<22x1xf32> to vector<22x32xf32>
    %6 = arith.subf %0, %5 : vector<22x32xf32>
    %7 = arith.mulf %6, %6 : vector<22x32xf32>
    %cst_2 = arith.constant dense<0.000000e+00> : vector<22xf32>
    %8 = vector.multi_reduction <add>, %7, %cst_2 [1] : vector<22x32xf32> to vector<22xf32>
    %9 = vector.shape_cast %8 : vector<22xf32> to vector<22x1xf32>
    %cst_3 = arith.constant 3.200000e+01 : f32
    %10 = vector.broadcast %cst_3 : f32 to vector<22x1xf32>
    %11 = arith.divf %9, %10 : vector<22x1xf32>
    %cst_4 = arith.constant 9.99999996E-13 : f32
    %12 = vector.broadcast %cst_4 : f32 to vector<22x1xf32>
    %13 = arith.addf %11, %12 : vector<22x1xf32>
    %14 = math.rsqrt %13 : vector<22x1xf32>
    %15 = vector.broadcast %14 : vector<22x1xf32> to vector<22x32xf32>
    %16 = arith.mulf %6, %15 : vector<22x32xf32>
    %c0_5 = arith.constant 0 : index
    %c0_6 = arith.constant 0 : index
    %17 = vector.load %arg3[%c0_5, %c0_6] : memref<1x32xf32, #tpu.memory_space<vmem>>, vector<1x32xf32>
    %18 = vector.broadcast %17 : vector<1x32xf32> to vector<22x32xf32>
    %19 = arith.mulf %16, %18 : vector<22x32xf32>
    %c0_7 = arith.constant 0 : index
    %c0_8 = arith.constant 0 : index
    %20 = vector.load %arg4[%c0_7, %c0_8] : memref<1x32xf32, #tpu.memory_space<vmem>>, vector<1x32xf32>
    %21 = vector.broadcast %20 : vector<1x32xf32> to vector<22x32xf32>
    %22 = arith.addf %19, %21 : vector<22x32xf32>
    %23 = arith.truncf %22 : vector<22x32xf32> to vector<22x32xbf16>
    %c0_9 = arith.constant 0 : index
    %c0_10 = arith.constant 0 : index
    %24 = vector.load %arg5[%c0_9, %c0_10] : memref<32x64xbf16, #tpu.memory_space<vmem>>, vector<32x64xbf16>
    %cst_11 = arith.constant dense<0.000000e+00> : vector<22x64xf32>
    %25 = tpu.matmul %23, %24, %cst_11 {dimension_numbers = #tpu.dot_dimension_numbers<[1], [0], [0], [1], [0, 0, 1, 1], [], []>} : vector<22x32xbf16>, vector<32x64xbf16>, vector<22x64xf32> -> vector<22x64xf32>
    %c0_12 = arith.constant 0 : index
    %c0_13 = arith.constant 0 : index
    %26 = vector.load %arg6[%c0_12, %c0_13] : memref<1x64xf32, #tpu.memory_space<vmem>>, vector<1x64xf32>
    %27 = vector.broadcast %26 : vector<1x64xf32> to vector<22x64xf32>
    %28 = arith.addf %25, %27 : vector<22x64xf32>
    %29 = arith.mulf %28, %28 : vector<22x64xf32>
    %30 = arith.mulf %28, %29 : vector<22x64xf32>
    %cst_14 = arith.constant 4.471500e-02 : f32
    %31 = vector.broadcast %cst_14 : f32 to vector<22x64xf32>
    %32 = arith.mulf %31, %30 : vector<22x64xf32>
    %33 = arith.addf %28, %32 : vector<22x64xf32>
    %cst_15 = arith.constant 0.797884583 : f32
    %34 = vector.broadcast %cst_15 : f32 to vector<22x64xf32>
    %35 = arith.mulf %34, %33 : vector<22x64xf32>
    %36 = math.tanh %35 : vector<22x64xf32>
    %cst_16 = arith.constant 1.000000e+00 : f32
    %37 = vector.broadcast %cst_16 : f32 to vector<22x64xf32>
    %38 = arith.addf %37, %36 : vector<22x64xf32>
    %cst_17 = arith.constant 5.000000e-01 : f32
    %39 = vector.broadcast %cst_17 : f32 to vector<22x64xf32>
    %40 = arith.mulf %39, %38 : vector<22x64xf32>
    %41 = arith.mulf %28, %40 : vector<22x64xf32>
    %c0_18 = arith.constant 0 : index
    %c0_19 = arith.constant 0 : index
    %42 = vector.load %arg7[%c0_18, %c0_19] : memref<22x64xf32, #tpu.memory_space<vmem>>, vector<22x64xf32>
    tpu.vector_store %arg7[%c0_18, %c0_19], %41 {strides = array<i32>} : memref<22x64xf32, #tpu.memory_space<vmem>>, vector<22x64xf32>,
    return
  }
  func.func @transform_0(%arg0: i32, %arg1: i32) -> (i32, i32) {
    %c0_i32 = arith.constant 0 : i32
    %c0_i32_0 = arith.constant 0 : i32
    return %arg0, %c0_i32 : i32, i32
  }
  func.func @transform_1(%arg0: i32, %arg1: i32) -> (i32, i32) {
    %c0_i32 = arith.constant 0 : i32
    %c0_i32_0 = arith.constant 0 : i32
    %c0_i32_1 = arith.constant 0 : i32
    return %c0_i32, %c0_i32_0 : i32, i32
  }
  func.func @transform_2(%arg0: i32, %arg1: i32) -> (i32, i32) {
    %c0_i32 = arith.constant 0 : i32
    %c0_i32_0 = arith.constant 0 : i32
    %c0_i32_1 = arith.constant 0 : i32
    return %c0_i32, %c0_i32_0 : i32, i32
  }
  func.func @transform_3(%arg0: i32, %arg1: i32) -> (i32, i32) {
    %c0_i32 = arith.constant 0 : i32
    %c0_i32_0 = arith.constant 0 : i32
    return %c0_i32, %arg1 : i32, i32
  }
  func.func @transform_4(%arg0: i32, %arg1: i32) -> (i32, i32) {
    %c0_i32 = arith.constant 0 : i32
    %c0_i32_0 = arith.constant 0 : i32
    return %c0_i32, %arg1 : i32, i32
  }
  func.func @transform_5(%arg0: i32, %arg1: i32) -> (i32, i32) {
    %c0_i32 = arith.constant 0 : i32
    return %arg0, %arg1 : i32, i32
  }
}

module attributes {stable_mosaic.version = 11 : i64} {
  func.func @_attention_out_kernel(%arg0: i32, %arg1: memref<1x11x96xf32, #tpu.memory_space<vmem>>, %arg2: memref<32x32xbf16, #tpu.memory_space<vmem>>, %arg3: memref<1x32xf32, #tpu.memory_space<vmem>>, %arg4: memref<1x11x32xf32, #tpu.memory_space<vmem>>, %arg5: memref<1x11x32xf32, #tpu.memory_space<vmem>>) attributes {dimension_semantics = [#tpu.dimension_semantics<parallel>], iteration_bounds = array<i64: 2>, scalar_prefetch = 0 : i64, scratch_operands = 0 : i64, tpu.core_type = #tpu.core_type<tc>, window_params = [{transform_indices = @transform_0, window_bounds = array<i64: 1, 11, 96>}, {pipeline_mode = #tpu.pipeline_mode<synchronous>, transform_indices = @transform_1, window_bounds = array<i64: 32, 32>}, {pipeline_mode = #tpu.pipeline_mode<synchronous>, transform_indices = @transform_2, window_bounds = array<i64: 1, 32>}, {transform_indices = @transform_3, window_bounds = array<i64: 1, 11, 32>}, {transform_indices = @transform_4, window_bounds = array<i64: 1, 11, 32>}]} {
    %c0 = arith.constant 0 : index
    %c0_0 = arith.constant 0 : index
    %c0_1 = arith.constant 0 : index
    %0 = vector.load %arg1[%c0, %c0_0, %c0_1] : memref<1x11x96xf32, #tpu.memory_space<vmem>>, vector<1x11x96xf32>
    %1 = vector.shape_cast %0 : vector<1x11x96xf32> to vector<11x96xf32>
    %2 = vector.extract_strided_slice %1 {offsets = [0, 0], sizes = [11, 8], strides = [1, 1]} : vector<11x96xf32> to vector<11x8xf32>
    %cst = arith.constant 0.353553385 : f32
    %3 = vector.broadcast %cst : f32 to vector<11x8xf32>
    %4 = arith.mulf %2, %3 : vector<11x8xf32>
    %5 = arith.truncf %4 : vector<11x8xf32> to vector<11x8xbf16>
    %6 = vector.extract_strided_slice %1 {offsets = [0, 32], sizes = [11, 8], strides = [1, 1]} : vector<11x96xf32> to vector<11x8xf32>
    %7 = arith.truncf %6 : vector<11x8xf32> to vector<11x8xbf16>
    %8 = vector.extract_strided_slice %1 {offsets = [0, 64], sizes = [11, 8], strides = [1, 1]} : vector<11x96xf32> to vector<11x8xf32>
    %9 = arith.truncf %8 : vector<11x8xf32> to vector<11x8xbf16>
    %cst_2 = arith.constant dense<0.000000e+00> : vector<11x11xf32>
    %10 = tpu.matmul %5, %7, %cst_2 {dimension_numbers = #tpu.dot_dimension_numbers<[1], [1], [0], [0], [0, 0, 1, 0], [], []>} : vector<11x8xbf16>, vector<11x8xbf16>, vector<11x11xf32> -> vector<11x11xf32>
    %cst_3 = arith.constant dense<0xFF800000> : vector<11xf32>
    %11 = vector.multi_reduction <maximumf>, %10, %cst_3 [1] : vector<11x11xf32> to vector<11xf32>
    %12 = vector.shape_cast %11 : vector<11xf32> to vector<11x1xf32>
    %13 = vector.broadcast %12 : vector<11x1xf32> to vector<11x11xf32>
    %14 = arith.subf %10, %13 : vector<11x11xf32>
    %15 = math.exp %14 : vector<11x11xf32>
    %cst_4 = arith.constant dense<0.000000e+00> : vector<11xf32>
    %16 = vector.multi_reduction <add>, %15, %cst_4 [1] : vector<11x11xf32> to vector<11xf32>
    %17 = vector.shape_cast %16 : vector<11xf32> to vector<11x1xf32>
    %18 = tpu.reciprocal %17 {approx = true} : vector<11x1xf32> -> vector<11x1xf32>
    %19 = vector.broadcast %18 : vector<11x1xf32> to vector<11x11xf32>
    %20 = arith.mulf %15, %19 : vector<11x11xf32>
    %21 = arith.truncf %20 : vector<11x11xf32> to vector<11x11xbf16>
    %cst_5 = arith.constant dense<0.000000e+00> : vector<11x8xf32>
    %22 = tpu.matmul %21, %9, %cst_5 {dimension_numbers = #tpu.dot_dimension_numbers<[1], [0], [0], [1], [0, 0, 1, 1], [], []>} : vector<11x11xbf16>, vector<11x8xbf16>, vector<11x8xf32> -> vector<11x8xf32>
    %23 = vector.extract_strided_slice %1 {offsets = [0, 8], sizes = [11, 8], strides = [1, 1]} : vector<11x96xf32> to vector<11x8xf32>
    %cst_6 = arith.constant 0.353553385 : f32
    %24 = vector.broadcast %cst_6 : f32 to vector<11x8xf32>
    %25 = arith.mulf %23, %24 : vector<11x8xf32>
    %26 = arith.truncf %25 : vector<11x8xf32> to vector<11x8xbf16>
    %27 = vector.extract_strided_slice %1 {offsets = [0, 40], sizes = [11, 8], strides = [1, 1]} : vector<11x96xf32> to vector<11x8xf32>
    %28 = arith.truncf %27 : vector<11x8xf32> to vector<11x8xbf16>
    %29 = vector.extract_strided_slice %1 {offsets = [0, 72], sizes = [11, 8], strides = [1, 1]} : vector<11x96xf32> to vector<11x8xf32>
    %30 = arith.truncf %29 : vector<11x8xf32> to vector<11x8xbf16>
    %cst_7 = arith.constant dense<0.000000e+00> : vector<11x11xf32>
    %31 = tpu.matmul %26, %28, %cst_7 {dimension_numbers = #tpu.dot_dimension_numbers<[1], [1], [0], [0], [0, 0, 1, 0], [], []>} : vector<11x8xbf16>, vector<11x8xbf16>, vector<11x11xf32> -> vector<11x11xf32>
    %cst_8 = arith.constant dense<0xFF800000> : vector<11xf32>
    %32 = vector.multi_reduction <maximumf>, %31, %cst_8 [1] : vector<11x11xf32> to vector<11xf32>
    %33 = vector.shape_cast %32 : vector<11xf32> to vector<11x1xf32>
    %34 = vector.broadcast %33 : vector<11x1xf32> to vector<11x11xf32>
    %35 = arith.subf %31, %34 : vector<11x11xf32>
    %36 = math.exp %35 : vector<11x11xf32>
    %cst_9 = arith.constant dense<0.000000e+00> : vector<11xf32>
    %37 = vector.multi_reduction <add>, %36, %cst_9 [1] : vector<11x11xf32> to vector<11xf32>
    %38 = vector.shape_cast %37 : vector<11xf32> to vector<11x1xf32>
    %39 = tpu.reciprocal %38 {approx = true} : vector<11x1xf32> -> vector<11x1xf32>
    %40 = vector.broadcast %39 : vector<11x1xf32> to vector<11x11xf32>
    %41 = arith.mulf %36, %40 : vector<11x11xf32>
    %42 = arith.truncf %41 : vector<11x11xf32> to vector<11x11xbf16>
    %cst_10 = arith.constant dense<0.000000e+00> : vector<11x8xf32>
    %43 = tpu.matmul %42, %30, %cst_10 {dimension_numbers = #tpu.dot_dimension_numbers<[1], [0], [0], [1], [0, 0, 1, 1], [], []>} : vector<11x11xbf16>, vector<11x8xbf16>, vector<11x8xf32> -> vector<11x8xf32>
    %44 = vector.extract_strided_slice %1 {offsets = [0, 16], sizes = [11, 8], strides = [1, 1]} : vector<11x96xf32> to vector<11x8xf32>
    %cst_11 = arith.constant 0.353553385 : f32
    %45 = vector.broadcast %cst_11 : f32 to vector<11x8xf32>
    %46 = arith.mulf %44, %45 : vector<11x8xf32>
    %47 = arith.truncf %46 : vector<11x8xf32> to vector<11x8xbf16>
    %48 = vector.extract_strided_slice %1 {offsets = [0, 48], sizes = [11, 8], strides = [1, 1]} : vector<11x96xf32> to vector<11x8xf32>
    %49 = arith.truncf %48 : vector<11x8xf32> to vector<11x8xbf16>
    %50 = vector.extract_strided_slice %1 {offsets = [0, 80], sizes = [11, 8], strides = [1, 1]} : vector<11x96xf32> to vector<11x8xf32>
    %51 = arith.truncf %50 : vector<11x8xf32> to vector<11x8xbf16>
    %cst_12 = arith.constant dense<0.000000e+00> : vector<11x11xf32>
    %52 = tpu.matmul %47, %49, %cst_12 {dimension_numbers = #tpu.dot_dimension_numbers<[1], [1], [0], [0], [0, 0, 1, 0], [], []>} : vector<11x8xbf16>, vector<11x8xbf16>, vector<11x11xf32> -> vector<11x11xf32>
    %cst_13 = arith.constant dense<0xFF800000> : vector<11xf32>
    %53 = vector.multi_reduction <maximumf>, %52, %cst_13 [1] : vector<11x11xf32> to vector<11xf32>
    %54 = vector.shape_cast %53 : vector<11xf32> to vector<11x1xf32>
    %55 = vector.broadcast %54 : vector<11x1xf32> to vector<11x11xf32>
    %56 = arith.subf %52, %55 : vector<11x11xf32>
    %57 = math.exp %56 : vector<11x11xf32>
    %cst_14 = arith.constant dense<0.000000e+00> : vector<11xf32>
    %58 = vector.multi_reduction <add>, %57, %cst_14 [1] : vector<11x11xf32> to vector<11xf32>
    %59 = vector.shape_cast %58 : vector<11xf32> to vector<11x1xf32>
    %60 = tpu.reciprocal %59 {approx = true} : vector<11x1xf32> -> vector<11x1xf32>
    %61 = vector.broadcast %60 : vector<11x1xf32> to vector<11x11xf32>
    %62 = arith.mulf %57, %61 : vector<11x11xf32>
    %63 = arith.truncf %62 : vector<11x11xf32> to vector<11x11xbf16>
    %cst_15 = arith.constant dense<0.000000e+00> : vector<11x8xf32>
    %64 = tpu.matmul %63, %51, %cst_15 {dimension_numbers = #tpu.dot_dimension_numbers<[1], [0], [0], [1], [0, 0, 1, 1], [], []>} : vector<11x11xbf16>, vector<11x8xbf16>, vector<11x8xf32> -> vector<11x8xf32>
    %65 = vector.extract_strided_slice %1 {offsets = [0, 24], sizes = [11, 8], strides = [1, 1]} : vector<11x96xf32> to vector<11x8xf32>
    %cst_16 = arith.constant 0.353553385 : f32
    %66 = vector.broadcast %cst_16 : f32 to vector<11x8xf32>
    %67 = arith.mulf %65, %66 : vector<11x8xf32>
    %68 = arith.truncf %67 : vector<11x8xf32> to vector<11x8xbf16>
    %69 = vector.extract_strided_slice %1 {offsets = [0, 56], sizes = [11, 8], strides = [1, 1]} : vector<11x96xf32> to vector<11x8xf32>
    %70 = arith.truncf %69 : vector<11x8xf32> to vector<11x8xbf16>
    %71 = vector.extract_strided_slice %1 {offsets = [0, 88], sizes = [11, 8], strides = [1, 1]} : vector<11x96xf32> to vector<11x8xf32>
    %72 = arith.truncf %71 : vector<11x8xf32> to vector<11x8xbf16>
    %cst_17 = arith.constant dense<0.000000e+00> : vector<11x11xf32>
    %73 = tpu.matmul %68, %70, %cst_17 {dimension_numbers = #tpu.dot_dimension_numbers<[1], [1], [0], [0], [0, 0, 1, 0], [], []>} : vector<11x8xbf16>, vector<11x8xbf16>, vector<11x11xf32> -> vector<11x11xf32>
    %cst_18 = arith.constant dense<0xFF800000> : vector<11xf32>
    %74 = vector.multi_reduction <maximumf>, %73, %cst_18 [1] : vector<11x11xf32> to vector<11xf32>
    %75 = vector.shape_cast %74 : vector<11xf32> to vector<11x1xf32>
    %76 = vector.broadcast %75 : vector<11x1xf32> to vector<11x11xf32>
    %77 = arith.subf %73, %76 : vector<11x11xf32>
    %78 = math.exp %77 : vector<11x11xf32>
    %cst_19 = arith.constant dense<0.000000e+00> : vector<11xf32>
    %79 = vector.multi_reduction <add>, %78, %cst_19 [1] : vector<11x11xf32> to vector<11xf32>
    %80 = vector.shape_cast %79 : vector<11xf32> to vector<11x1xf32>
    %81 = tpu.reciprocal %80 {approx = true} : vector<11x1xf32> -> vector<11x1xf32>
    %82 = vector.broadcast %81 : vector<11x1xf32> to vector<11x11xf32>
    %83 = arith.mulf %78, %82 : vector<11x11xf32>
    %84 = arith.truncf %83 : vector<11x11xf32> to vector<11x11xbf16>
    %cst_20 = arith.constant dense<0.000000e+00> : vector<11x8xf32>
    %85 = tpu.matmul %84, %72, %cst_20 {dimension_numbers = #tpu.dot_dimension_numbers<[1], [0], [0], [1], [0, 0, 1, 1], [], []>} : vector<11x11xbf16>, vector<11x8xbf16>, vector<11x8xf32> -> vector<11x8xf32>
    %86 = tpu.concatenate %22, %43, %64, %85 in 1 : vector<11x8xf32>, vector<11x8xf32>, vector<11x8xf32>, vector<11x8xf32> -> vector<11x32xf32>
    %87 = arith.truncf %86 : vector<11x32xf32> to vector<11x32xbf16>
    %c0_21 = arith.constant 0 : index
    %c0_22 = arith.constant 0 : index
    %88 = vector.load %arg2[%c0_21, %c0_22] : memref<32x32xbf16, #tpu.memory_space<vmem>>, vector<32x32xbf16>
    %cst_23 = arith.constant dense<0.000000e+00> : vector<11x32xf32>
    %89 = tpu.matmul %87, %88, %cst_23 {dimension_numbers = #tpu.dot_dimension_numbers<[1], [0], [0], [1], [0, 0, 1, 1], [], []>} : vector<11x32xbf16>, vector<32x32xbf16>, vector<11x32xf32> -> vector<11x32xf32>
    %c0_24 = arith.constant 0 : index
    %c0_25 = arith.constant 0 : index
    %90 = vector.load %arg3[%c0_24, %c0_25] : memref<1x32xf32, #tpu.memory_space<vmem>>, vector<1x32xf32>
    %91 = vector.broadcast %90 : vector<1x32xf32> to vector<11x32xf32>
    %92 = arith.addf %89, %91 : vector<11x32xf32>
    %c0_26 = arith.constant 0 : index
    %c0_27 = arith.constant 0 : index
    %c0_28 = arith.constant 0 : index
    %93 = vector.load %arg4[%c0_26, %c0_27, %c0_28] : memref<1x11x32xf32, #tpu.memory_space<vmem>>, vector<1x11x32xf32>
    %94 = vector.shape_cast %93 : vector<1x11x32xf32> to vector<11x32xf32>
    %95 = arith.addf %92, %94 : vector<11x32xf32>
    %96 = vector.shape_cast %95 : vector<11x32xf32> to vector<1x11x32xf32>
    %c0_29 = arith.constant 0 : index
    %c0_30 = arith.constant 0 : index
    %c0_31 = arith.constant 0 : index
    %97 = vector.load %arg5[%c0_29, %c0_30, %c0_31] : memref<1x11x32xf32, #tpu.memory_space<vmem>>, vector<1x11x32xf32>
    tpu.vector_store %arg5[%c0_29, %c0_30, %c0_31], %96 {strides = array<i32>} : memref<1x11x32xf32, #tpu.memory_space<vmem>>, vector<1x11x32xf32>,
    return
  }
  func.func @transform_0(%arg0: i32) -> (i32, i32, i32) {
    %c0_i32 = arith.constant 0 : i32
    %c0_i32_0 = arith.constant 0 : i32
    %c0_i32_1 = arith.constant 0 : i32
    return %arg0, %c0_i32, %c0_i32_0 : i32, i32, i32
  }
  func.func @transform_1(%arg0: i32) -> (i32, i32) {
    %c0_i32 = arith.constant 0 : i32
    %c0_i32_0 = arith.constant 0 : i32
    %c0_i32_1 = arith.constant 0 : i32
    return %c0_i32, %c0_i32_0 : i32, i32
  }
  func.func @transform_2(%arg0: i32) -> (i32, i32) {
    %c0_i32 = arith.constant 0 : i32
    %c0_i32_0 = arith.constant 0 : i32
    %c0_i32_1 = arith.constant 0 : i32
    return %c0_i32, %c0_i32_0 : i32, i32
  }
  func.func @transform_3(%arg0: i32) -> (i32, i32, i32) {
    %c0_i32 = arith.constant 0 : i32
    %c0_i32_0 = arith.constant 0 : i32
    %c0_i32_1 = arith.constant 0 : i32
    return %arg0, %c0_i32, %c0_i32_0 : i32, i32, i32
  }
  func.func @transform_4(%arg0: i32) -> (i32, i32, i32) {
    %c0_i32 = arith.constant 0 : i32
    %c0_i32_0 = arith.constant 0 : i32
    %c0_i32_1 = arith.constant 0 : i32
    return %arg0, %c0_i32, %c0_i32_0 : i32, i32, i32
  }
}

module attributes {stable_mosaic.version = 11 : i64} {
  func.func @_ffn_adapter_kernel(%arg0: i32, %arg1: memref<22x64xf32, #tpu.memory_space<vmem>>, %arg2: memref<64x32xbf16, #tpu.memory_space<vmem>>, %arg3: memref<1x32xf32, #tpu.memory_space<vmem>>, %arg4: memref<32x8xbf16, #tpu.memory_space<vmem>>, %arg5: memref<1x8xf32, #tpu.memory_space<vmem>>, %arg6: memref<8x32xbf16, #tpu.memory_space<vmem>>, %arg7: memref<1x32xf32, #tpu.memory_space<vmem>>, %arg8: memref<22x32xf32, #tpu.memory_space<vmem>>, %arg9: memref<22x32xf32, #tpu.memory_space<vmem>>) attributes {dimension_semantics = [#tpu.dimension_semantics<parallel>], iteration_bounds = array<i64: 1>, scalar_prefetch = 0 : i64, scratch_operands = 0 : i64, tpu.core_type = #tpu.core_type<tc>, window_params = [{transform_indices = @transform_0, window_bounds = array<i64: 22, 64>}, {pipeline_mode = #tpu.pipeline_mode<synchronous>, transform_indices = @transform_1, window_bounds = array<i64: 64, 32>}, {pipeline_mode = #tpu.pipeline_mode<synchronous>, transform_indices = @transform_2, window_bounds = array<i64: 1, 32>}, {pipeline_mode = #tpu.pipeline_mode<synchronous>, transform_indices = @transform_3, window_bounds = array<i64: 32, 8>}, {pipeline_mode = #tpu.pipeline_mode<synchronous>, transform_indices = @transform_4, window_bounds = array<i64: 1, 8>}, {pipeline_mode = #tpu.pipeline_mode<synchronous>, transform_indices = @transform_5, window_bounds = array<i64: 8, 32>}, {pipeline_mode = #tpu.pipeline_mode<synchronous>, transform_indices = @transform_6, window_bounds = array<i64: 1, 32>}, {transform_indices = @transform_7, window_bounds = array<i64: 22, 32>}, {transform_indices = @transform_8, window_bounds = array<i64: 22, 32>}]} {
    %c0 = arith.constant 0 : index
    %c0_0 = arith.constant 0 : index
    %0 = vector.load %arg1[%c0, %c0_0] : memref<22x64xf32, #tpu.memory_space<vmem>>, vector<22x64xf32>
    %1 = arith.truncf %0 : vector<22x64xf32> to vector<22x64xbf16>
    %c0_1 = arith.constant 0 : index
    %c0_2 = arith.constant 0 : index
    %2 = vector.load %arg2[%c0_1, %c0_2] : memref<64x32xbf16, #tpu.memory_space<vmem>>, vector<64x32xbf16>
    %cst = arith.constant dense<0.000000e+00> : vector<22x32xf32>
    %3 = tpu.matmul %1, %2, %cst {dimension_numbers = #tpu.dot_dimension_numbers<[1], [0], [0], [1], [0, 0, 1, 1], [], []>} : vector<22x64xbf16>, vector<64x32xbf16>, vector<22x32xf32> -> vector<22x32xf32>
    %c0_3 = arith.constant 0 : index
    %c0_4 = arith.constant 0 : index
    %4 = vector.load %arg3[%c0_3, %c0_4] : memref<1x32xf32, #tpu.memory_space<vmem>>, vector<1x32xf32>
    %5 = vector.broadcast %4 : vector<1x32xf32> to vector<22x32xf32>
    %6 = arith.addf %3, %5 : vector<22x32xf32>
    %7 = arith.truncf %6 : vector<22x32xf32> to vector<22x32xbf16>
    %c0_5 = arith.constant 0 : index
    %c0_6 = arith.constant 0 : index
    %8 = vector.load %arg4[%c0_5, %c0_6] : memref<32x8xbf16, #tpu.memory_space<vmem>>, vector<32x8xbf16>
    %cst_7 = arith.constant dense<0.000000e+00> : vector<22x8xf32>
    %9 = tpu.matmul %7, %8, %cst_7 {dimension_numbers = #tpu.dot_dimension_numbers<[1], [0], [0], [1], [0, 0, 1, 1], [], []>} : vector<22x32xbf16>, vector<32x8xbf16>, vector<22x8xf32> -> vector<22x8xf32>
    %c0_8 = arith.constant 0 : index
    %c0_9 = arith.constant 0 : index
    %10 = vector.load %arg5[%c0_8, %c0_9] : memref<1x8xf32, #tpu.memory_space<vmem>>, vector<1x8xf32>
    %11 = vector.broadcast %10 : vector<1x8xf32> to vector<22x8xf32>
    %12 = arith.addf %9, %11 : vector<22x8xf32>
    %13 = arith.mulf %12, %12 : vector<22x8xf32>
    %14 = arith.mulf %12, %13 : vector<22x8xf32>
    %cst_10 = arith.constant 4.471500e-02 : f32
    %15 = vector.broadcast %cst_10 : f32 to vector<22x8xf32>
    %16 = arith.mulf %15, %14 : vector<22x8xf32>
    %17 = arith.addf %12, %16 : vector<22x8xf32>
    %cst_11 = arith.constant 0.797884583 : f32
    %18 = vector.broadcast %cst_11 : f32 to vector<22x8xf32>
    %19 = arith.mulf %18, %17 : vector<22x8xf32>
    %20 = math.tanh %19 : vector<22x8xf32>
    %cst_12 = arith.constant 1.000000e+00 : f32
    %21 = vector.broadcast %cst_12 : f32 to vector<22x8xf32>
    %22 = arith.addf %21, %20 : vector<22x8xf32>
    %cst_13 = arith.constant 5.000000e-01 : f32
    %23 = vector.broadcast %cst_13 : f32 to vector<22x8xf32>
    %24 = arith.mulf %23, %22 : vector<22x8xf32>
    %25 = arith.mulf %12, %24 : vector<22x8xf32>
    %26 = arith.truncf %25 : vector<22x8xf32> to vector<22x8xbf16>
    %c0_14 = arith.constant 0 : index
    %c0_15 = arith.constant 0 : index
    %27 = vector.load %arg6[%c0_14, %c0_15] : memref<8x32xbf16, #tpu.memory_space<vmem>>, vector<8x32xbf16>
    %cst_16 = arith.constant dense<0.000000e+00> : vector<22x32xf32>
    %28 = tpu.matmul %26, %27, %cst_16 {dimension_numbers = #tpu.dot_dimension_numbers<[1], [0], [0], [1], [0, 0, 1, 1], [], []>} : vector<22x8xbf16>, vector<8x32xbf16>, vector<22x32xf32> -> vector<22x32xf32>
    %c0_17 = arith.constant 0 : index
    %c0_18 = arith.constant 0 : index
    %29 = vector.load %arg7[%c0_17, %c0_18] : memref<1x32xf32, #tpu.memory_space<vmem>>, vector<1x32xf32>
    %30 = vector.broadcast %29 : vector<1x32xf32> to vector<22x32xf32>
    %31 = arith.addf %28, %30 : vector<22x32xf32>
    %c0_19 = arith.constant 0 : index
    %c0_20 = arith.constant 0 : index
    %32 = vector.load %arg8[%c0_19, %c0_20] : memref<22x32xf32, #tpu.memory_space<vmem>>, vector<22x32xf32>
    %33 = arith.addf %31, %32 : vector<22x32xf32>
    %34 = arith.addf %33, %6 : vector<22x32xf32>
    %c0_21 = arith.constant 0 : index
    %c0_22 = arith.constant 0 : index
    %35 = vector.load %arg9[%c0_21, %c0_22] : memref<22x32xf32, #tpu.memory_space<vmem>>, vector<22x32xf32>
    tpu.vector_store %arg9[%c0_21, %c0_22], %34 {strides = array<i32>} : memref<22x32xf32, #tpu.memory_space<vmem>>, vector<22x32xf32>,
    return
  }
  func.func @transform_0(%arg0: i32) -> (i32, i32) {
    %c0_i32 = arith.constant 0 : i32
    %c0_i32_0 = arith.constant 0 : i32
    return %arg0, %c0_i32 : i32, i32
  }
  func.func @transform_1(%arg0: i32) -> (i32, i32) {
    %c0_i32 = arith.constant 0 : i32
    %c0_i32_0 = arith.constant 0 : i32
    %c0_i32_1 = arith.constant 0 : i32
    return %c0_i32, %c0_i32_0 : i32, i32
  }
  func.func @transform_2(%arg0: i32) -> (i32, i32) {
    %c0_i32 = arith.constant 0 : i32
    %c0_i32_0 = arith.constant 0 : i32
    %c0_i32_1 = arith.constant 0 : i32
    return %c0_i32, %c0_i32_0 : i32, i32
  }
  func.func @transform_3(%arg0: i32) -> (i32, i32) {
    %c0_i32 = arith.constant 0 : i32
    %c0_i32_0 = arith.constant 0 : i32
    %c0_i32_1 = arith.constant 0 : i32
    return %c0_i32, %c0_i32_0 : i32, i32
  }
  func.func @transform_4(%arg0: i32) -> (i32, i32) {
    %c0_i32 = arith.constant 0 : i32
    %c0_i32_0 = arith.constant 0 : i32
    %c0_i32_1 = arith.constant 0 : i32
    return %c0_i32, %c0_i32_0 : i32, i32
  }
  func.func @transform_5(%arg0: i32) -> (i32, i32) {
    %c0_i32 = arith.constant 0 : i32
    %c0_i32_0 = arith.constant 0 : i32
    %c0_i32_1 = arith.constant 0 : i32
    return %c0_i32, %c0_i32_0 : i32, i32
  }
  func.func @transform_6(%arg0: i32) -> (i32, i32) {
    %c0_i32 = arith.constant 0 : i32
    %c0_i32_0 = arith.constant 0 : i32
    %c0_i32_1 = arith.constant 0 : i32
    return %c0_i32, %c0_i32_0 : i32, i32
  }
  func.func @transform_7(%arg0: i32) -> (i32, i32) {
    %c0_i32 = arith.constant 0 : i32
    %c0_i32_0 = arith.constant 0 : i32
    return %arg0, %c0_i32 : i32, i32
  }
  func.func @transform_8(%arg0: i32) -> (i32, i32) {
    %c0_i32 = arith.constant 0 : i32
    %c0_i32_0 = arith.constant 0 : i32
    return %arg0, %c0_i32 : i32, i32
  }
}

module attributes {stable_mosaic.version = 11 : i64} {
  func.func @_ln_matmul_kernel(%arg0: i32, %arg1: i32, %arg2: memref<2x32xf32, #tpu.memory_space<vmem>>, %arg3: memref<1x32xf32, #tpu.memory_space<vmem>>, %arg4: memref<1x32xf32, #tpu.memory_space<vmem>>, %arg5: memref<32x5xbf16, #tpu.memory_space<vmem>>, %arg6: memref<1x5xf32, #tpu.memory_space<vmem>>, %arg7: memref<2x5xf32, #tpu.memory_space<vmem>>) attributes {dimension_semantics = [#tpu.dimension_semantics<parallel>, #tpu.dimension_semantics<parallel>], iteration_bounds = array<i64: 1, 1>, scalar_prefetch = 0 : i64, scratch_operands = 0 : i64, tpu.core_type = #tpu.core_type<tc>, window_params = [{transform_indices = @transform_0, window_bounds = array<i64: 2, 32>}, {pipeline_mode = #tpu.pipeline_mode<synchronous>, transform_indices = @transform_1, window_bounds = array<i64: 1, 32>}, {pipeline_mode = #tpu.pipeline_mode<synchronous>, transform_indices = @transform_2, window_bounds = array<i64: 1, 32>}, {transform_indices = @transform_3, window_bounds = array<i64: 32, 5>}, {transform_indices = @transform_4, window_bounds = array<i64: 1, 5>}, {transform_indices = @transform_5, window_bounds = array<i64: 2, 5>}]} {
    %c0 = arith.constant 0 : index
    %c0_0 = arith.constant 0 : index
    %0 = vector.load %arg2[%c0, %c0_0] : memref<2x32xf32, #tpu.memory_space<vmem>>, vector<2x32xf32>
    %cst = arith.constant dense<0.000000e+00> : vector<2xf32>
    %1 = vector.multi_reduction <add>, %0, %cst [1] : vector<2x32xf32> to vector<2xf32>
    %2 = vector.shape_cast %1 : vector<2xf32> to vector<2x1xf32>
    %cst_1 = arith.constant 3.200000e+01 : f32
    %3 = vector.broadcast %cst_1 : f32 to vector<2x1xf32>
    %4 = arith.divf %2, %3 : vector<2x1xf32>
    %5 = vector.broadcast %4 : vector<2x1xf32> to vector<2x32xf32>
    %6 = arith.subf %0, %5 : vector<2x32xf32>
    %7 = arith.mulf %6, %6 : vector<2x32xf32>
    %cst_2 = arith.constant dense<0.000000e+00> : vector<2xf32>
    %8 = vector.multi_reduction <add>, %7, %cst_2 [1] : vector<2x32xf32> to vector<2xf32>
    %9 = vector.shape_cast %8 : vector<2xf32> to vector<2x1xf32>
    %cst_3 = arith.constant 3.200000e+01 : f32
    %10 = vector.broadcast %cst_3 : f32 to vector<2x1xf32>
    %11 = arith.divf %9, %10 : vector<2x1xf32>
    %cst_4 = arith.constant 9.99999996E-13 : f32
    %12 = vector.broadcast %cst_4 : f32 to vector<2x1xf32>
    %13 = arith.addf %11, %12 : vector<2x1xf32>
    %14 = math.rsqrt %13 : vector<2x1xf32>
    %15 = vector.broadcast %14 : vector<2x1xf32> to vector<2x32xf32>
    %16 = arith.mulf %6, %15 : vector<2x32xf32>
    %c0_5 = arith.constant 0 : index
    %c0_6 = arith.constant 0 : index
    %17 = vector.load %arg3[%c0_5, %c0_6] : memref<1x32xf32, #tpu.memory_space<vmem>>, vector<1x32xf32>
    %18 = vector.broadcast %17 : vector<1x32xf32> to vector<2x32xf32>
    %19 = arith.mulf %16, %18 : vector<2x32xf32>
    %c0_7 = arith.constant 0 : index
    %c0_8 = arith.constant 0 : index
    %20 = vector.load %arg4[%c0_7, %c0_8] : memref<1x32xf32, #tpu.memory_space<vmem>>, vector<1x32xf32>
    %21 = vector.broadcast %20 : vector<1x32xf32> to vector<2x32xf32>
    %22 = arith.addf %19, %21 : vector<2x32xf32>
    %23 = arith.truncf %22 : vector<2x32xf32> to vector<2x32xbf16>
    %c0_9 = arith.constant 0 : index
    %c0_10 = arith.constant 0 : index
    %24 = vector.load %arg5[%c0_9, %c0_10] : memref<32x5xbf16, #tpu.memory_space<vmem>>, vector<32x5xbf16>
    %cst_11 = arith.constant dense<0.000000e+00> : vector<2x5xf32>
    %25 = tpu.matmul %23, %24, %cst_11 {dimension_numbers = #tpu.dot_dimension_numbers<[1], [0], [0], [1], [0, 0, 1, 1], [], []>} : vector<2x32xbf16>, vector<32x5xbf16>, vector<2x5xf32> -> vector<2x5xf32>
    %c0_12 = arith.constant 0 : index
    %c0_13 = arith.constant 0 : index
    %26 = vector.load %arg6[%c0_12, %c0_13] : memref<1x5xf32, #tpu.memory_space<vmem>>, vector<1x5xf32>
    %27 = vector.broadcast %26 : vector<1x5xf32> to vector<2x5xf32>
    %28 = arith.addf %25, %27 : vector<2x5xf32>
    %c0_14 = arith.constant 0 : index
    %c0_15 = arith.constant 0 : index
    %29 = vector.load %arg7[%c0_14, %c0_15] : memref<2x5xf32, #tpu.memory_space<vmem>>, vector<2x5xf32>
    tpu.vector_store %arg7[%c0_14, %c0_15], %28 {strides = array<i32>} : memref<2x5xf32, #tpu.memory_space<vmem>>, vector<2x5xf32>,
    return
  }
  func.func @transform_0(%arg0: i32, %arg1: i32) -> (i32, i32) {
    %c0_i32 = arith.constant 0 : i32
    %c0_i32_0 = arith.constant 0 : i32
    return %arg0, %c0_i32 : i32, i32
  }
  func.func @transform_1(%arg0: i32, %arg1: i32) -> (i32, i32) {
    %c0_i32 = arith.constant 0 : i32
    %c0_i32_0 = arith.constant 0 : i32
    %c0_i32_1 = arith.constant 0 : i32
    return %c0_i32, %c0_i32_0 : i32, i32
  }
  func.func @transform_2(%arg0: i32, %arg1: i32) -> (i32, i32) {
    %c0_i32 = arith.constant 0 : i32
    %c0_i32_0 = arith.constant 0 : i32
    %c0_i32_1 = arith.constant 0 : i32
    return %c0_i32, %c0_i32_0 : i32, i32
  }
  func.func @transform_3(%arg0: i32, %arg1: i32) -> (i32, i32) {
    %c0_i32 = arith.constant 0 : i32
    %c0_i32_0 = arith.constant 0 : i32
    return %c0_i32, %arg1 : i32, i32
  }
  func.func @transform_4(%arg0: i32, %arg1: i32) -> (i32, i32) {
    %c0_i32 = arith.constant 0 : i32
    %c0_i32_0 = arith.constant 0 : i32
    return %c0_i32, %arg1 : i32, i32
  }
  func.func @transform_5(%arg0: i32, %arg1: i32) -> (i32, i32) {
    %c0_i32 = arith.constant 0 : i32
    return %arg0, %arg1 : i32, i32
  }
}

</mosaic_0001>

<llo_original>
// kernel: ast_adapter_forward.10
$region0: #{ast_adapter_forward.10}
  #allocation0 [shape = 'u32[]', space=smem, size = 0x4, offset = 0x4, fixed_abs, tag = 'smem constant byte address 0x4 - core index']
  #allocation1 [shape = 'u32[144,128]{1,0:T(1,128)}', space=vmem, size = 0x12000, scoped, tag = 'internal scratch']
  %s0 = inlined_call_operand.vmem [shape: f32[18,256], index: 0, kind: input, shape index: {}]
  %s1 = inlined_call_operand.vmem [shape: bf16[256,32], index: 1, kind: input, shape index: {}]
  %s2 = inlined_call_operand.vmem [shape: f32[1,32], index: 2, kind: input, shape index: {}]
  %s3 = inlined_call_operand.vmem [shape: f32[18,32], index: 3, kind: output, shape index: {}]
  %s4 = sld [smem:[#allocation0]]
  $region22: #{ast_adapter_forward.10} parent=0
    _
  %s6 = ssub.s32 1, %s4
  %s7 = scalar_select 0, %s6, %s4
  // Predicated region
  $region2: #{ast_adapter_forward.10} parent=0 // pred_check
    _
  $region3: #{ast_adapter_forward.10} parent=0 // pred_check_branch
    %9 = sbr.rel (0) target = $region5
  $region4: #{ast_adapter_forward.10} parent=0 // pred_region
    _
  $region5: #{ast_adapter_forward.10} parent=0 // pred_fallthru
    _
  // Predicated region
  $region6: #{ast_adapter_forward.10} parent=0 // pred_check
    _
  $region7: #{ast_adapter_forward.10} parent=0 // pred_check_branch
    %11 = sbr.rel (0) target = $region9
  $region8: #{ast_adapter_forward.10} parent=0 // pred_region
    _
  $region9: #{ast_adapter_forward.10} parent=0 // pred_fallthru
    _
  // Predicated region
  $region10: #{ast_adapter_forward.10} parent=0 // pred_check
    _
  $region11: #{ast_adapter_forward.10} parent=0 // pred_check_branch
    %13 = sbr.rel (0) target = $region13
  $region12: #{ast_adapter_forward.10} parent=0 // pred_region
    _
  $region13: #{ast_adapter_forward.10} parent=0 // pred_fallthru
    _
  %v15 = vld [vmem:[%s0] sm:$0xff]
  %v16 = vld [vmem:[%s0 + $0x8] sm:$0xff]
  %v17 = vld [vmem:[%s0 + $0x10] sm:$0xff]
  %v18 = vld [vmem:[%s0 + $0x18] sm:$0xff]
  %v19 = vld [vmem:[%s0 + $0x20] sm:$0x3]
  %v20 = vld [vmem:[%s0 + $0x28] sm:$0x3]
  %v21 = vpack.c.bf16 %v17, %v15
  %v22 = vpack.c.bf16 %v18, %v16
  %v23 = vpack.c.bf16 %v19, %v19
  %v24 = vpack.c.bf16 %v20, %v20
  %v25 = vld [vmem:[%s1] sm:$0xf]
  %v26 = vld [vmem:[%s1 + $0x4] sm:$0xf]
  %v27 = vld [vmem:[%s1 + $0x8] sm:$0xf]
  %v28 = vld [vmem:[%s1 + $0xc] sm:$0xf]
  %v29 = vld [vmem:[%s1 + $0x10] sm:$0xf]
  %v30 = vld [vmem:[%s1 + $0x14] sm:$0xf]
  %v31 = vld [vmem:[%s1 + $0x18] sm:$0xf]
  %v32 = vld [vmem:[%s1 + $0x1c] sm:$0xf]
  %v33 = vld [vmem:[%s1 + $0x20] sm:$0xf]
  %v34 = vld [vmem:[%s1 + $0x24] sm:$0xf]
  %v35 = vld [vmem:[%s1 + $0x28] sm:$0xf]
  %v36 = vld [vmem:[%s1 + $0x2c] sm:$0xf]
  %v37 = vld [vmem:[%s1 + $0x30] sm:$0xf]
  %v38 = vld [vmem:[%s1 + $0x34] sm:$0xf]
  %v39 = vld [vmem:[%s1 + $0x38] sm:$0xf]
  %v40 = vld [vmem:[%s1 + $0x3c] sm:$0xf]
  %v41 = vld [vmem:[%s1 + $0x40] sm:$0xf]
  %v42 = vld [vmem:[%s1 + $0x44] sm:$0xf]
  %v43 = vld [vmem:[%s1 + $0x48] sm:$0xf]
  %v44 = vld [vmem:[%s1 + $0x4c] sm:$0xf]
  %v45 = vld [vmem:[%s1 + $0x50] sm:$0xf]
  %v46 = vld [vmem:[%s1 + $0x54] sm:$0xf]
  %v47 = vld [vmem:[%s1 + $0x58] sm:$0xf]
  %v48 = vld [vmem:[%s1 + $0x5c] sm:$0xf]
  %v49 = vld [vmem:[%s1 + $0x60] sm:$0xf]
  %v50 = vld [vmem:[%s1 + $0x64] sm:$0xf]
  %v51 = vld [vmem:[%s1 + $0x68] sm:$0xf]
  %v52 = vld [vmem:[%s1 + $0x6c] sm:$0xf]
  %v53 = vld [vmem:[%s1 + $0x70] sm:$0xf]
  %v54 = vld [vmem:[%s1 + $0x74] sm:$0xf]
  %v55 = vld [vmem:[%s1 + $0x78] sm:$0xf]
  %v56 = vld [vmem:[%s1 + $0x7c] sm:$0xf]
  %v57 = vld [vmem:[%s2] sm:$0x1]
  %v59 = vlaneseq
  %v60 = vshrl.u32 %v59, 7
  %v61 = vsub.s32 0, %v60
  %v62 = vrot.slane %v57, %v61
  %v96 = vunpack.c.l.b16 %v25
  %v97 = vunpack.c.l.b16 %v26
  %v98 = vunpack.c.l.b16 %v27
  %v99 = vunpack.c.l.b16 %v28
  %v100 = vunpack.c.l.b16 %v29
  %v101 = vunpack.c.l.b16 %v30
  %v102 = vunpack.c.l.b16 %v31
  %v103 = vunpack.c.l.b16 %v32
  %v104 = vunpack.c.l.b16 %v33
  %v105 = vunpack.c.l.b16 %v34
  %v106 = vunpack.c.l.b16 %v35
  %v107 = vunpack.c.l.b16 %v36
  %v108 = vunpack.c.l.b16 %v37
  %v109 = vunpack.c.l.b16 %v38
  %v110 = vunpack.c.l.b16 %v39
  %v111 = vunpack.c.l.b16 %v40
  %v112 = vunpack.c.l.b16 %v41
  %v113 = vunpack.c.l.b16 %v42
  %v114 = vunpack.c.l.b16 %v43
  %v115 = vunpack.c.l.b16 %v44
  %v116 = vunpack.c.l.b16 %v45
  %v117 = vunpack.c.l.b16 %v46
  %v118 = vunpack.c.l.b16 %v47
  %v119 = vunpack.c.l.b16 %v48
  %v120 = vunpack.c.l.b16 %v49
  %v121 = vunpack.c.l.b16 %v50
  %v122 = vunpack.c.l.b16 %v51
  %v123 = vunpack.c.l.b16 %v52
  %v124 = vunpack.c.l.b16 %v53
  %v125 = vunpack.c.l.b16 %v54
  %v126 = vunpack.c.l.b16 %v55
  %v127 = vunpack.c.l.b16 %v56
  %v128 = vpack.c.b16 %v97, %v96
  %v129 = vpack.c.b16 %v99, %v98
  %v130 = vpack.c.b16 %v101, %v100
  %v131 = vpack.c.b16 %v103, %v102
  %v132 = vpack.c.b16 %v105, %v104
  %v133 = vpack.c.b16 %v107, %v106
  %v134 = vpack.c.b16 %v109, %v108
  %v135 = vpack.c.b16 %v111, %v110
  %v136 = vpack.c.b16 %v113, %v112
  %v137 = vpack.c.b16 %v115, %v114
  %v138 = vpack.c.b16 %v117, %v116
  %v139 = vpack.c.b16 %v119, %v118
  %v140 = vpack.c.b16 %v121, %v120
  %v141 = vpack.c.b16 %v123, %v122
  %v142 = vpack.c.b16 %v125, %v124
  %v143 = vpack.c.b16 %v127, %v126
  %160 = vmatprep.subr.bf16.mxu0 0
  %161 = vmatpush1.bf16.msra.mxu0 %v128
  %162 = vmatprep.subr.bf16.mxu0 0
  %163 = vmatpush1.bf16.msra.mxu0 %v129
  %164 = vmatprep.subr.bf16.mxu0 0
  %165 = vmatpush1.bf16.msra.mxu0 %v130
  %166 = vmatprep.subr.bf16.mxu0 0
  %167 = vmatpush1.bf16.msra.mxu0 %v131
  %168 = vmatprep.subr.bf16.mxu0 0
  %169 = vmatpush1.bf16.msra.mxu0 %v132
  %170 = vmatprep.subr.bf16.mxu0 0
  %171 = vmatpush1.bf16.msra.mxu0 %v133
  %172 = vmatprep.subr.bf16.mxu0 0
  %173 = vmatpush1.bf16.msra.mxu0 %v134
  %174 = vmatprep.subr.bf16.mxu0 0
  %175 = vmatpush1.bf16.msra.mxu0 %v135
  %176 = vmatprep.subr.bf16.mxu0 0
  %177 = vmatpush1.bf16.msra.mxu0 %v136
  %178 = vmatprep.subr.bf16.mxu0 0
  %179 = vmatpush1.bf16.msra.mxu0 %v137
  %180 = vmatprep.subr.bf16.mxu0 0
  %181 = vmatpush1.bf16.msra.mxu0 %v138
  %182 = vmatprep.subr.bf16.mxu0 0
  %183 = vmatpush1.bf16.msra.mxu0 %v139
  %184 = vmatprep.subr.bf16.mxu0 0
  %185 = vmatpush1.bf16.msra.mxu0 %v140
  %186 = vmatprep.subr.bf16.mxu0 0
  %187 = vmatpush1.bf16.msra.mxu0 %v141
  %188 = vmatprep.subr.bf16.mxu0 0
  %189 = vmatpush1.bf16.msra.mxu0 %v142
  %190 = vmatprep.subr.bf16.mxu0 0
  %191 = vmatpush1.bf16.msra.mxu0 %v143
  %192 = vmatprep.mubr.bf16.mxu0 %v22
  %193 = vmatmul.mubr.bf16.gmra.mrb[0].mxu0 %v21
  %v194 = vpop.f32.mrb[0].mxu0
  %v195 = vadd.f32 %v62, %v194
  %v196 = vpop.f32.mrb[0].mxu0
  %v197 = vpop.f32.mrb[0].mxu0
  %v198 = vadd.f32 %v62, %v197
  %v199 = vpop.f32.mrb[0].mxu0
  %200 = vmatprep.mubr.bf16.mxu0 %v24
  %201 = vmatmul.mubr.bf16.gmra.mrb[0].mxu0 %v23
  %v202 = vpop.f32.mrb[0].mxu0
  %v203 = vadd.f32 %v62, %v202
  %v204 = vpop.f32.mrb[0].mxu0
  %v205 = vpop.f32.mrb[0].mxu0
  %v206 = vpop.f32.mrb[0].mxu0
  %207 = vdwg.mxu0
  %vm208 = vcmask 261120
  %209 = vst.msk [vmem:[%s3] sm:$0xff] %vm208, %v195
  %210 = vst.msk [vmem:[%s3 + $0x8] sm:$0xff] %vm208, %v198
  %vm211 = vcmask 254976
  %212 = vst.msk [vmem:[%s3 + $0x10] sm:$0x3] %vm211, %v203
  // Predicated region
  $region14: #{ast_adapter_forward.10} parent=0 // pred_check
    _
  $region15: #{ast_adapter_forward.10} parent=0 // pred_check_branch
    %214 = sbr.rel (0) target = $region17
  $region16: #{ast_adapter_forward.10} parent=0 // pred_region
    _
  $region17: #{ast_adapter_forward.10} parent=0 // pred_fallthru
    _
  // Predicated region
  $region18: #{ast_adapter_forward.10} parent=0 // pred_check
    _
  $region19: #{ast_adapter_forward.10} parent=0 // pred_check_branch
    %216 = sbr.rel (0) target = $region21
  $region20: #{ast_adapter_forward.10} parent=0 // pred_region
    _
  $region21: #{ast_adapter_forward.10} parent=0 // pred_fallthru
    _

// kernel: ast_adapter_forward.11
$region0: #{ast_adapter_forward.11}
  #allocation0 [shape = 'u32[]', space=smem, size = 0x4, offset = 0x4, fixed_abs, tag = 'smem constant byte address 0x4 - core index']
  #allocation1 [shape = 'u32[144,128]{1,0:T(1,128)}', space=vmem, size = 0x12000, scoped, tag = 'internal scratch']
  %s0 = inlined_call_operand.vmem [shape: f32[22,32], index: 0, kind: input, shape index: {}]
  %s1 = inlined_call_operand.vmem [shape: f32[1,32], index: 1, kind: input, shape index: {}]
  %s2 = inlined_call_operand.vmem [shape: f32[1,32], index: 2, kind: input, shape index: {}]
  %s3 = inlined_call_operand.vmem [shape: bf16[32,96], index: 3, kind: input, shape index: {}]
  %s4 = inlined_call_operand.vmem [shape: f32[1,96], index: 4, kind: input, shape index: {}]
  %s5 = inlined_call_operand.vmem [shape: f32[22,96], index: 5, kind: output, shape index: {}]
  %s6 = sld [smem:[#allocation0]]
  $region30: #{ast_adapter_forward.11} parent=0
    _
  %s8 = ssub.s32 1, %s6
  %s9 = scalar_select 0, %s8, %s6
  // Predicated region
  $region2: #{ast_adapter_forward.11} parent=0 // pred_check
    _
  $region3: #{ast_adapter_forward.11} parent=0 // pred_check_branch
    %11 = sbr.rel (0) target = $region5
  $region4: #{ast_adapter_forward.11} parent=0 // pred_region
    _
  $region5: #{ast_adapter_forward.11} parent=0 // pred_fallthru
    _
  // Predicated region
  $region6: #{ast_adapter_forward.11} parent=0 // pred_check
    _
  $region7: #{ast_adapter_forward.11} parent=0 // pred_check_branch
    %13 = sbr.rel (0) target = $region9
  $region8: #{ast_adapter_forward.11} parent=0 // pred_region
    _
  $region9: #{ast_adapter_forward.11} parent=0 // pred_fallthru
    _
  // Predicated region
  $region10: #{ast_adapter_forward.11} parent=0 // pred_check
    _
  $region11: #{ast_adapter_forward.11} parent=0 // pred_check_branch
    %15 = sbr.rel (0) target = $region13
  $region12: #{ast_adapter_forward.11} parent=0 // pred_region
    _
  $region13: #{ast_adapter_forward.11} parent=0 // pred_fallthru
    _
  // Predicated region
  $region14: #{ast_adapter_forward.11} parent=0 // pred_check
    _
  $region15: #{ast_adapter_forward.11} parent=0 // pred_check_branch
    %17 = sbr.rel (0) target = $region17
  $region16: #{ast_adapter_forward.11} parent=0 // pred_region
    _
  $region17: #{ast_adapter_forward.11} parent=0 // pred_fallthru
    _
  // Predicated region
  $region18: #{ast_adapter_forward.11} parent=0 // pred_check
    _
  $region19: #{ast_adapter_forward.11} parent=0 // pred_check_branch
    %19 = sbr.rel (0) target = $region21
  $region20: #{ast_adapter_forward.11} parent=0 // pred_region
    _
  $region21: #{ast_adapter_forward.11} parent=0 // pred_fallthru
    _
  %v21 = vld [vmem:[%s0] sm:$0xff]
  %v22 = vld [vmem:[%s0 + $0x8] sm:$0xff]
  %v23 = vld [vmem:[%s0 + $0x10] sm:$0x3f]
  %vm24 = vcmask 261120
  %v25 = vsel %vm24, %v21, 0.0
  %26 = vadd.xlane.f32.xlu0 %v25
  %v27 = vpop.xlane.xlu0 %26
  %v28 = vsel %vm24, %v22, 0.0
  %29 = vadd.xlane.f32.xlu0 %v28
  %v30 = vpop.xlane.xlu0 %29
  %vm31 = vcmask 259072
  %v32 = vsel %vm31, %v23, 0.0
  %33 = vadd.xlane.f32.xlu0 %v32
  %v34 = vpop.xlane.xlu0 %33
  %v35 = vrcp.pop 32.0
  %v36 = vmul.f32 %v27, %v35
  %v37 = vmul.f32 %v30, %v35
  %v38 = vmul.f32 %v34, %v35
  %v39 = vsub.f32 %v21, %v36
  %v40 = vsub.f32 %v22, %v37
  %v41 = vsub.f32 %v23, %v38
  %v42 = vmul.f32 %v39, %v39
  %v43 = vmul.f32 %v40, %v40
  %v44 = vmul.f32 %v41, %v41
  %v45 = vsel %vm24, %v42, 0.0
  %46 = vadd.xlane.f32.xlu0 %v45
  %v47 = vpop.xlane.xlu0 %46
  %v48 = vsel %vm24, %v43, 0.0
  %49 = vadd.xlane.f32.xlu0 %v48
  %v50 = vpop.xlane.xlu0 %49
  %v51 = vsel %vm31, %v44, 0.0
  %52 = vadd.xlane.f32.xlu0 %v51
  %v53 = vpop.xlane.xlu0 %52
  %v54 = vmul.f32 %v47, %v35
  %v55 = vmul.f32 %v50, %v35
  %v56 = vmul.f32 %v53, %v35
  %v57 = vadd.f32 %v54, 1e-12
  %v58 = vadd.f32 %v55, 1e-12
  %v59 = vadd.f32 %v56, 1e-12
  %v60 = vrsqrt.pop %v57
  %v61 = vrsqrt.pop %v58
  %v62 = vrsqrt.pop %v59
  %v63 = vmul.f32 %v39, %v60
  %v64 = vmul.f32 %v40, %v61
  %v65 = vmul.f32 %v41, %v62
  %v66 = vld [vmem:[%s1] sm:$0x1]
  %v68 = vlaneseq
  %v69 = vshrl.u32 %v68, 7
  %v70 = vsub.s32 0, %v69
  %v71 = vrot.slane %v66, %v70
  %v73 = vmul.f32 %v63, %v71
  %v74 = vmul.f32 %v64, %v71
  %v75 = vmul.f32 %v65, %v71
  %v76 = vld [vmem:[%s2] sm:$0x1]
  %v78 = vlaneseq
  %v79 = vshrl.u32 %v78, 7
  %v80 = vsub.s32 0, %v79
  %v81 = vrot.slane %v76, %v80
  %v83 = vadd.f32 %v73, %v81
  %v84 = vadd.f32 %v74, %v81
  %v85 = vadd.f32 %v75, %v81
  %v86 = vpack.c.bf16 %v84, %v83
  %v87 = vpack.c.bf16 %v85, %v85
  %v88 = vld [vmem:[%s3] sm:$0xf]
  %v89 = vld [vmem:[%s3 + $0x4] sm:$0xf]
  %v90 = vld [vmem:[%s3 + $0x8] sm:$0xf]
  %v91 = vld [vmem:[%s3 + $0xc] sm:$0xf]
  %v92 = vld [vmem:[%s4] sm:$0x1]
  %v94 = vlaneseq
  %v95 = vshrl.u32 %v94, 7
  %v96 = vsub.s32 0, %v95
  %v97 = vrot.slane %v92, %v96
  %v103 = vunpack.c.l.b16 %v88
  %v104 = vunpack.c.l.b16 %v89
  %v105 = vunpack.c.l.b16 %v90
  %v106 = vunpack.c.l.b16 %v91
  %v107 = vpack.c.b16 %v104, %v103
  %v108 = vpack.c.b16 %v106, %v105
  %v112 = vsel %vm24, %v86, 0
  %v115 = vsel %vm24, %v87, 0
  %117 = vmatprep.subr.bf16.mxu0 0
  %118 = vmatpush1.bf16.msra.mxu0 %v107
  %119 = vmatprep.subr.bf16.mxu0 0
  %120 = vmatpush1.bf16.msra.mxu0 %v108
  %121 = vmatprep.subr.bf16.mxu0 0
  %122 = vmatpush1.bf16.msra.mxu0 0
  %123 = vmatprep.subr.bf16.mxu0 0
  %124 = vmatpush1.bf16.msra.mxu0 0
  %125 = vmatprep.subr.bf16.mxu0 0
  %126 = vmatpush1.bf16.msra.mxu0 0
  %127 = vmatprep.subr.bf16.mxu0 0
  %128 = vmatpush1.bf16.msra.mxu0 0
  %129 = vmatprep.subr.bf16.mxu0 0
  %130 = vmatpush1.bf16.msra.mxu0 0
  %131 = vmatprep.subr.bf16.mxu0 0
  %132 = vmatpush1.bf16.msra.mxu0 0
  %133 = vmatprep.subr.bf16.mxu0 0
  %134 = vmatpush1.bf16.msra.mxu0 0
  %135 = vmatprep.subr.bf16.mxu0 0
  %136 = vmatpush1.bf16.msra.mxu0 0
  %137 = vmatprep.subr.bf16.mxu0 0
  %138 = vmatpush1.bf16.msra.mxu0 0
  %139 = vmatprep.subr.bf16.mxu0 0
  %140 = vmatpush1.bf16.msra.mxu0 0
  %141 = vmatprep.subr.bf16.mxu0 0
  %142 = vmatpush1.bf16.msra.mxu0 0
  %143 = vmatprep.subr.bf16.mxu0 0
  %144 = vmatpush1.bf16.msra.mxu0 0
  %145 = vmatprep.subr.bf16.mxu0 0
  %146 = vmatpush1.bf16.msra.mxu0 0
  %147 = vmatprep.subr.bf16.mxu0 0
  %148 = vmatpush1.bf16.msra.mxu0 0
  %149 = vmatprep.mubr.bf16.mxu0 0
  %150 = vmatmul.mubr.bf16.gmra.mrb[0].mxu0 %v112
  %v151 = vpop.f32.mrb[0].mxu0
  %v152 = vadd.f32 %v97, %v151
  %v153 = vpop.f32.mrb[0].mxu0
  %v154 = vpop.f32.mrb[0].mxu0
  %v155 = vadd.f32 %v97, %v154
  %v156 = vpop.f32.mrb[0].mxu0
  %157 = vmatprep.mubr.bf16.mxu0 0
  %158 = vmatmul.mubr.bf16.gmra.mrb[0].mxu0 %v115
  %v159 = vpop.f32.mrb[0].mxu0
  %v160 = vadd.f32 %v97, %v159
  %v161 = vpop.f32.mrb[0].mxu0
  %v162 = vpop.f32.mrb[0].mxu0
  %v163 = vpop.f32.mrb[0].mxu0
  %164 = vdwg.mxu0
  %vm165 = vcmask 785408
  %166 = vst.msk [vmem:[%s5] sm:$0xff] %vm165, %v152
  %167 = vst.msk [vmem:[%s5 + $0x8] sm:$0xff] %vm165, %v155
  %vm168 = vcmask 783360
  %169 = vst.msk [vmem:[%s5 + $0x10] sm:$0x3f] %vm168, %v160
  // Predicated region
  $region22: #{ast_adapter_forward.11} parent=0 // pred_check
    _
  $region23: #{ast_adapter_forward.11} parent=0 // pred_check_branch
    %171 = sbr.rel (0) target = $region25
  $region24: #{ast_adapter_forward.11} parent=0 // pred_region
    _
  $region25: #{ast_adapter_forward.11} parent=0 // pred_fallthru
    _
  // Predicated region
  $region26: #{ast_adapter_forward.11} parent=0 // pred_check
    _
  $region27: #{ast_adapter_forward.11} parent=0 // pred_check_branch
    %173 = sbr.rel (0) target = $region29
  $region28: #{ast_adapter_forward.11} parent=0 // pred_region
    _
  $region29: #{ast_adapter_forward.11} parent=0 // pred_fallthru
    _

// kernel: ast_adapter_forward.13
$region0: #{ast_adapter_forward.13}
  #allocation0 [shape = 'u32[]', space=smem, size = 0x4, offset = 0x4, fixed_abs, tag = 'smem constant byte address 0x4 - core index']
  #allocation1 [shape = 'u32[144,128]{1,0:T(1,128)}', space=vmem, size = 0x12000, scoped, tag = 'internal scratch']
  %s0 = inlined_call_operand.vmem [shape: f32[22,32], index: 0, kind: input, shape index: {}]
  %s1 = inlined_call_operand.vmem [shape: f32[1,32], index: 1, kind: input, shape index: {}]
  %s2 = inlined_call_operand.vmem [shape: f32[1,32], index: 2, kind: input, shape index: {}]
  %s3 = inlined_call_operand.vmem [shape: bf16[32,64], index: 3, kind: input, shape index: {}]
  %s4 = inlined_call_operand.vmem [shape: f32[1,64], index: 4, kind: input, shape index: {}]
  %s5 = inlined_call_operand.vmem [shape: f32[22,64], index: 5, kind: output, shape index: {}]
  %s6 = sld [smem:[#allocation0]]
  $region30: #{ast_adapter_forward.13} parent=0
    _
  %s8 = ssub.s32 1, %s6
  %s9 = scalar_select 0, %s8, %s6
  // Predicated region
  $region2: #{ast_adapter_forward.13} parent=0 // pred_check
    _
  $region3: #{ast_adapter_forward.13} parent=0 // pred_check_branch
    %11 = sbr.rel (0) target = $region5
  $region4: #{ast_adapter_forward.13} parent=0 // pred_region
    _
  $region5: #{ast_adapter_forward.13} parent=0 // pred_fallthru
    _
  // Predicated region
  $region6: #{ast_adapter_forward.13} parent=0 // pred_check
    _
  $region7: #{ast_adapter_forward.13} parent=0 // pred_check_branch
    %13 = sbr.rel (0) target = $region9
  $region8: #{ast_adapter_forward.13} parent=0 // pred_region
    _
  $region9: #{ast_adapter_forward.13} parent=0 // pred_fallthru
    _
  // Predicated region
  $region10: #{ast_adapter_forward.13} parent=0 // pred_check
    _
  $region11: #{ast_adapter_forward.13} parent=0 // pred_check_branch
    %15 = sbr.rel (0) target = $region13
  $region12: #{ast_adapter_forward.13} parent=0 // pred_region
    _
  $region13: #{ast_adapter_forward.13} parent=0 // pred_fallthru
    _
  // Predicated region
  $region14: #{ast_adapter_forward.13} parent=0 // pred_check
    _
  $region15: #{ast_adapter_forward.13} parent=0 // pred_check_branch
    %17 = sbr.rel (0) target = $region17
  $region16: #{ast_adapter_forward.13} parent=0 // pred_region
    _
  $region17: #{ast_adapter_forward.13} parent=0 // pred_fallthru
    _
  // Predicated region
  $region18: #{ast_adapter_forward.13} parent=0 // pred_check
    _
  $region19: #{ast_adapter_forward.13} parent=0 // pred_check_branch
    %19 = sbr.rel (0) target = $region21
  $region20: #{ast_adapter_forward.13} parent=0 // pred_region
    _
  $region21: #{ast_adapter_forward.13} parent=0 // pred_fallthru
    _
  %v21 = vld [vmem:[%s0] sm:$0xff]
  %v22 = vld [vmem:[%s0 + $0x8] sm:$0xff]
  %v23 = vld [vmem:[%s0 + $0x10] sm:$0x3f]
  %vm24 = vcmask 261120
  %v25 = vsel %vm24, %v21, 0.0
  %26 = vadd.xlane.f32.xlu0 %v25
  %v27 = vpop.xlane.xlu0 %26
  %v28 = vsel %vm24, %v22, 0.0
  %29 = vadd.xlane.f32.xlu0 %v28
  %v30 = vpop.xlane.xlu0 %29
  %vm31 = vcmask 259072
  %v32 = vsel %vm31, %v23, 0.0
  %33 = vadd.xlane.f32.xlu0 %v32
  %v34 = vpop.xlane.xlu0 %33
  %v35 = vrcp.pop 32.0
  %v36 = vmul.f32 %v27, %v35
  %v37 = vmul.f32 %v30, %v35
  %v38 = vmul.f32 %v34, %v35
  %v39 = vsub.f32 %v21, %v36
  %v40 = vsub.f32 %v22, %v37
  %v41 = vsub.f32 %v23, %v38
  %v42 = vmul.f32 %v39, %v39
  %v43 = vmul.f32 %v40, %v40
  %v44 = vmul.f32 %v41, %v41
  %v45 = vsel %vm24, %v42, 0.0
  %46 = vadd.xlane.f32.xlu0 %v45
  %v47 = vpop.xlane.xlu0 %46
  %v48 = vsel %vm24, %v43, 0.0
  %49 = vadd.xlane.f32.xlu0 %v48
  %v50 = vpop.xlane.xlu0 %49
  %v51 = vsel %vm31, %v44, 0.0
  %52 = vadd.xlane.f32.xlu0 %v51
  %v53 = vpop.xlane.xlu0 %52
  %v54 = vmul.f32 %v47, %v35
  %v55 = vmul.f32 %v50, %v35
  %v56 = vmul.f32 %v53, %v35
  %v57 = vadd.f32 %v54, 1e-12
  %v58 = vadd.f32 %v55, 1e-12
  %v59 = vadd.f32 %v56, 1e-12
  %v60 = vrsqrt.pop %v57
  %v61 = vrsqrt.pop %v58
  %v62 = vrsqrt.pop %v59
  %v63 = vmul.f32 %v39, %v60
  %v64 = vmul.f32 %v40, %v61
  %v65 = vmul.f32 %v41, %v62
  %v66 = vld [vmem:[%s1] sm:$0x1]
  %v68 = vlaneseq
  %v69 = vshrl.u32 %v68, 7
  %v70 = vsub.s32 0, %v69
  %v71 = vrot.slane %v66, %v70
  %v73 = vmul.f32 %v63, %v71
  %v74 = vmul.f32 %v64, %v71
  %v75 = vmul.f32 %v65, %v71
  %v76 = vld [vmem:[%s2] sm:$0x1]
  %v78 = vlaneseq
  %v79 = vshrl.u32 %v78, 7
  %v80 = vsub.s32 0, %v79
  %v81 = vrot.slane %v76, %v80
  %v83 = vadd.f32 %v73, %v81
  %v84 = vadd.f32 %v74, %v81
  %v85 = vadd.f32 %v75, %v81
  %v86 = vpack.c.bf16 %v84, %v83
  %v87 = vpack.c.bf16 %v85, %v85
  %v88 = vld [vmem:[%s3] sm:$0xf]
  %v89 = vld [vmem:[%s3 + $0x4] sm:$0xf]
  %v90 = vld [vmem:[%s3 + $0x8] sm:$0xf]
  %v91 = vld [vmem:[%s3 + $0xc] sm:$0xf]
  %v92 = vld [vmem:[%s4] sm:$0x1]
  %v94 = vlaneseq
  %v95 = vshrl.u32 %v94, 7
  %v96 = vsub.s32 0, %v95
  %v97 = vrot.slane %v92, %v96
  %v103 = vunpack.c.l.b16 %v88
  %v104 = vunpack.c.l.b16 %v89
  %v105 = vunpack.c.l.b16 %v90
  %v106 = vunpack.c.l.b16 %v91
  %v107 = vpack.c.b16 %v104, %v103
  %v108 = vpack.c.b16 %v106, %v105
  %v112 = vsel %vm24, %v86, 0
  %v115 = vsel %vm24, %v87, 0
  %117 = vmatprep.subr.bf16.mxu0 0
  %118 = vmatpush1.bf16.msra.mxu0 %v107
  %119 = vmatprep.subr.bf16.mxu0 0
  %120 = vmatpush1.bf16.msra.mxu0 %v108
  %121 = vmatprep.subr.bf16.mxu0 0
  %122 = vmatpush1.bf16.msra.mxu0 0
  %123 = vmatprep.subr.bf16.mxu0 0
  %124 = vmatpush1.bf16.msra.mxu0 0
  %125 = vmatprep.subr.bf16.mxu0 0
  %126 = vmatpush1.bf16.msra.mxu0 0
  %127 = vmatprep.subr.bf16.mxu0 0
  %128 = vmatpush1.bf16.msra.mxu0 0
  %129 = vmatprep.subr.bf16.mxu0 0
  %130 = vmatpush1.bf16.msra.mxu0 0
  %131 = vmatprep.subr.bf16.mxu0 0
  %132 = vmatpush1.bf16.msra.mxu0 0
  %133 = vmatprep.subr.bf16.mxu0 0
  %134 = vmatpush1.bf16.msra.mxu0 0
  %135 = vmatprep.subr.bf16.mxu0 0
  %136 = vmatpush1.bf16.msra.mxu0 0
  %137 = vmatprep.subr.bf16.mxu0 0
  %138 = vmatpush1.bf16.msra.mxu0 0
  %139 = vmatprep.subr.bf16.mxu0 0
  %140 = vmatpush1.bf16.msra.mxu0 0
  %141 = vmatprep.subr.bf16.mxu0 0
  %142 = vmatpush1.bf16.msra.mxu0 0
  %143 = vmatprep.subr.bf16.mxu0 0
  %144 = vmatpush1.bf16.msra.mxu0 0
  %145 = vmatprep.subr.bf16.mxu0 0
  %146 = vmatpush1.bf16.msra.mxu0 0
  %147 = vmatprep.subr.bf16.mxu0 0
  %148 = vmatpush1.bf16.msra.mxu0 0
  %149 = vmatprep.mubr.bf16.mxu0 0
  %150 = vmatmul.mubr.bf16.gmra.mrb[0].mxu0 %v112
  %v151 = vpop.f32.mrb[0].mxu0
  %v152 = vadd.f32 %v97, %v151
  %v153 = vpop.f32.mrb[0].mxu0
  %v154 = vpop.f32.mrb[0].mxu0
  %v155 = vadd.f32 %v97, %v154
  %v156 = vpop.f32.mrb[0].mxu0
  %157 = vmatprep.mubr.bf16.mxu0 0
  %158 = vmatmul.mubr.bf16.gmra.mrb[0].mxu0 %v115
  %v159 = vpop.f32.mrb[0].mxu0
  %v160 = vadd.f32 %v97, %v159
  %v161 = vpop.f32.mrb[0].mxu0
  %v162 = vpop.f32.mrb[0].mxu0
  %v163 = vpop.f32.mrb[0].mxu0
  %164 = vdwg.mxu0
  %v165 = vmul.f32 %v152, %v152
  %v166 = vmul.f32 %v155, %v155
  %v167 = vmul.f32 %v160, %v160
  %v168 = vmul.f32 %v152, %v165
  %v169 = vmul.f32 %v155, %v166
  %v170 = vmul.f32 %v160, %v167
  %v171 = vmul.f32 %v168, 0.044715
  %v172 = vmul.f32 %v169, 0.044715
  %v173 = vmul.f32 %v170, 0.044715
  %v174 = vadd.f32 %v152, %v171
  %v175 = vadd.f32 %v155, %v172
  %v176 = vadd.f32 %v160, %v173
  %v177 = vmul.f32 %v174, 0.7978846
  %v178 = vmul.f32 %v175, 0.7978846
  %v179 = vmul.f32 %v176, 0.7978846
  %v180 = vtanh.pop %v177
  %v181 = vtanh.pop %v178
  %v182 = vtanh.pop %v179
  %v183 = vadd.f32 %v180, 1.0
  %v184 = vadd.f32 %v181, 1.0
  %v185 = vadd.f32 %v182, 1.0
  %v186 = vmul.f32 %v183, 0.5
  %v187 = vmul.f32 %v184, 0.5
  %v188 = vmul.f32 %v185, 0.5
  %v189 = vmul.f32 %v152, %v186
  %v190 = vmul.f32 %v155, %v187
  %v191 = vmul.f32 %v160, %v188
  %vm192 = vcmask 523264
  %193 = vst.msk [vmem:[%s5] sm:$0xff] %vm192, %v189
  %194 = vst.msk [vmem:[%s5 + $0x8] sm:$0xff] %vm192, %v190
  %vm195 = vcmask 521216
  %196 = vst.msk [vmem:[%s5 + $0x10] sm:$0x3f] %vm195, %v191
  // Predicated region
  $region22: #{ast_adapter_forward.13} parent=0 // pred_check
    _
  $region23: #{ast_adapter_forward.13} parent=0 // pred_check_branch
    %198 = sbr.rel (0) target = $region25
  $region24: #{ast_adapter_forward.13} parent=0 // pred_region
    _
  $region25: #{ast_adapter_forward.13} parent=0 // pred_fallthru
    _
  // Predicated region
  $region26: #{ast_adapter_forward.13} parent=0 // pred_check
    _
  $region27: #{ast_adapter_forward.13} parent=0 // pred_check_branch
    %200 = sbr.rel (0) target = $region29
  $region28: #{ast_adapter_forward.13} parent=0 // pred_region
    _
  $region29: #{ast_adapter_forward.13} parent=0 // pred_fallthru
    _

// kernel: ast_adapter_forward.12
$region0: #{ast_adapter_forward.12}
  #allocation0 [shape = 'u32[]', space=smem, size = 0x4, offset = 0x4, fixed_abs, tag = 'smem constant byte address 0x4 - core index']
  #allocation1 [shape = 'u32[144,128]{1,0:T(1,128)}', space=vmem, size = 0x12000, scoped, tag = 'internal scratch']
  %s0 = inlined_call_operand.vmem [shape: f32[2,11,96], index: 0, kind: input, shape index: {}]
  %s1 = inlined_call_operand.vmem [shape: bf16[32,32], index: 1, kind: input, shape index: {}]
  %s2 = inlined_call_operand.vmem [shape: f32[1,32], index: 2, kind: input, shape index: {}]
  %s3 = inlined_call_operand.vmem [shape: f32[2,11,32], index: 3, kind: input, shape index: {}]
  %s4 = inlined_call_operand.vmem [shape: f32[2,11,32], index: 4, kind: output, shape index: {}]
  %s5 = sld [smem:[#allocation0]]
  $region49: #{ast_adapter_forward.12} parent=0
    _
  %s7 = ssub.s32 1, %s5
  %s8 = scalar_select 0, %s7, %s5
  loop: start=0, step=1, limit=4
  $region2: #{ast_adapter_forward.12} parent=0 // loop_pre_header
    _
  $region3: #{ast_adapter_forward.12} parent=0 // loop_header
    %s10 = sphi 0, %s14
    %p11 = scmp.ge.s32.totalorder %s10, 4
    %s20 = sphi 0, %s22
    %s23 = sphi 0, %s20
    %s24 = sphi 0, %s23
    %s40 = sphi 0, %s24
    %s44 = sphi 0, %s44
    %s46 = sphi 0, %s44
    %s47 = sphi 0, %s46
    %s61 = sphi 0, %s47
    %s65 = sphi 0, %s65
    %s67 = sphi 0, %s65
    %s68 = sphi 0, %s67
    %s82 = sphi 0, %s68
    %s88 = sphi 0, %s90
    %s91 = sphi 0, %s88
    %s92 = sphi 0, %s91
    %s108 = sphi 0, %s92
    %s114 = sphi 0, %s116
    %s117 = sphi 0, %s114
    %s118 = sphi 0, %s117
    %s134 = sphi 0, %s118
  $region4: #{ast_adapter_forward.12} parent=0 // loop_header_branch
    %13 = sbr.rel (%p11) target = $region8
  $region5: #{ast_adapter_forward.12} parent=0 // loop_body
    %s15 = ssub.s32 %s10, 1
    %s16 = ssub.s32 %s10, 2
    %s17 = sadd.s32 %s10, 1
    %s18 = ssub.s32 %s10, %s17
    %p19 = scmp.eq.s32.totalorder %s18, 0
    %s21 = sadd.s32 %s20, 1
    %s22 = scalar_select %p19, %s20, %s21
    %p25 = pneg %p19
    %p26 = scmp.eq.s32.totalorder %s10, 1
    %p27 = por %p25, %p26
    %p28 = scmp.ne.s32.totalorder %s20, %s23
    %p29 = scmp.eq.s32.totalorder %s10, 0
    %p30 = por %p28, %p29
    %p31 = scmp.ne.s32.totalorder %s20, %s23
    %p32 = scmp.eq.s32.totalorder %s15, 1
    %p33 = por %p31, %p32
    %p34 = scmp.ne.s32.totalorder %s23, %s24
    %p35 = scmp.eq.s32.totalorder %s15, 0
    %p36 = por %p34, %p35
    %p37 = scmp.ne.s32.totalorder %s23, %s24
    %p38 = scmp.eq.s32.totalorder %s16, 1
    %p39 = por %p37, %p38
    %p41 = scmp.ne.s32.totalorder %s24, %s40
    %p42 = scmp.eq.s32.totalorder %s16, 0
    %p43 = por %p41, %p42
    %s45 = sadd.s32 %s44, 1
    %p48 = scmp.eq.s32.totalorder %s10, 1
    %p49 = scmp.ne.s32.totalorder %s44, %s46
    %p50 = scmp.eq.s32.totalorder %s10, 0
    %p51 = por %p49, %p50
    %p52 = scmp.ne.s32.totalorder %s44, %s46
    %p53 = scmp.eq.s32.totalorder %s15, 1
    %p54 = por %p52, %p53
    %p55 = scmp.ne.s32.totalorder %s46, %s47
    %p56 = scmp.eq.s32.totalorder %s15, 0
    %p57 = por %p55, %p56
    %p58 = scmp.ne.s32.totalorder %s46, %s47
    %p59 = scmp.eq.s32.totalorder %s16, 1
    %p60 = por %p58, %p59
    %p62 = scmp.ne.s32.totalorder %s47, %s61
    %p63 = scmp.eq.s32.totalorder %s16, 0
    %p64 = por %p62, %p63
    %s66 = sadd.s32 %s65, 1
    %p69 = scmp.eq.s32.totalorder %s10, 1
    %p70 = scmp.ne.s32.totalorder %s65, %s67
    %p71 = scmp.eq.s32.totalorder %s10, 0
    %p72 = por %p70, %p71
    %p73 = scmp.ne.s32.totalorder %s65, %s67
    %p74 = scmp.eq.s32.totalorder %s15, 1
    %p75 = por %p73, %p74
    %p76 = scmp.ne.s32.totalorder %s67, %s68
    %p77 = scmp.eq.s32.totalorder %s15, 0
    %p78 = por %p76, %p77
    %p79 = scmp.ne.s32.totalorder %s67, %s68
    %p80 = scmp.eq.s32.totalorder %s16, 1
    %p81 = por %p79, %p80
    %p83 = scmp.ne.s32.totalorder %s68, %s82
    %p84 = scmp.eq.s32.totalorder %s16, 0
    %p85 = por %p83, %p84
    %s86 = ssub.s32 %s10, %s17
    %p87 = scmp.eq.s32.totalorder %s86, 0
    %s89 = sadd.s32 %s88, 1
    %s90 = scalar_select %p87, %s88, %s89
    %p93 = pneg %p87
    %p94 = scmp.eq.s32.totalorder %s10, 1
    %p95 = por %p93, %p94
    %p96 = scmp.ne.s32.totalorder %s88, %s91
    %p97 = scmp.eq.s32.totalorder %s10, 0
    %p98 = por %p96, %p97
    %p99 = scmp.ne.s32.totalorder %s88, %s91
    %p100 = scmp.eq.s32.totalorder %s15, 1
    %p101 = por %p99, %p100
    %p102 = scmp.ne.s32.totalorder %s91, %s92
    %p103 = scmp.eq.s32.totalorder %s15, 0
    %p104 = por %p102, %p103
    %p105 = scmp.ne.s32.totalorder %s91, %s92
    %p106 = scmp.eq.s32.totalorder %s16, 1
    %p107 = por %p105, %p106
    %p109 = scmp.ne.s32.totalorder %s92, %s108
    %p110 = scmp.eq.s32.totalorder %s16, 0
    %p111 = por %p109, %p110
    %s112 = ssub.s32 %s10, %s17
    %p113 = scmp.eq.s32.totalorder %s112, 0
    %s115 = sadd.s32 %s114, 1
    %s116 = scalar_select %p113, %s114, %s115
    %p119 = pneg %p113
    %p120 = scmp.eq.s32.totalorder %s10, 1
    %p121 = por %p119, %p120
    %p122 = scmp.ne.s32.totalorder %s114, %s117
    %p123 = scmp.eq.s32.totalorder %s10, 0
    %p124 = por %p122, %p123
    %p125 = scmp.ne.s32.totalorder %s114, %s117
    %p126 = scmp.eq.s32.totalorder %s15, 1
    %p127 = por %p125, %p126
    %p128 = scmp.ne.s32.totalorder %s117, %s118
    %p129 = scmp.eq.s32.totalorder %s15, 0
    %p130 = por %p128, %p129
    %p131 = scmp.ne.s32.totalorder %s117, %s118
    %p132 = scmp.eq.s32.totalorder %s16, 1
    %p133 = por %p131, %p132
    %p135 = scmp.ne.s32.totalorder %s118, %s134
    %p136 = scmp.eq.s32.totalorder %s16, 0
    %p137 = por %p135, %p136
    %p138 = scmp.le.s32.totalorder 1, %s10
    %p139 = scmp.lt.s32.totalorder %s10, 3
    %p140 = pnand %p138, %p139
    %p141 = pneg %p140
    // Predicated region
    $region9: #{ast_adapter_forward.12} parent=5 // pred_check
      _
    $region10: #{ast_adapter_forward.12} parent=5 // pred_check_branch
      %143 = sbr.rel (%p140) target = $region12
    $region11: #{ast_adapter_forward.12} parent=5 // pred_region
      %s144 = ssub.s32 %s10, 1
      // Predicated region
      $region13: #{ast_adapter_forward.12} parent=11 // pred_check
        %p145 = pneg %p57
      $region14: #{ast_adapter_forward.12} parent=11 // pred_check_branch
        %147 = sbr.rel (%p145) target = $region16
      $region15: #{ast_adapter_forward.12} parent=11 // pred_region
        _
      $region16: #{ast_adapter_forward.12} parent=11 // pred_fallthru
        _
      // Predicated region
      $region17: #{ast_adapter_forward.12} parent=11 // pred_check
        %p148 = pneg %p78
      $region18: #{ast_adapter_forward.12} parent=11 // pred_check_branch
        %150 = sbr.rel (%p148) target = $region20
      $region19: #{ast_adapter_forward.12} parent=11 // pred_region
        _
      $region20: #{ast_adapter_forward.12} parent=11 // pred_fallthru
        _
    $region12: #{ast_adapter_forward.12} parent=5 // pred_fallthru
      _
    %p151 = scmp.lt.s32.totalorder %s10, 2
    // Predicated region
    $region21: #{ast_adapter_forward.12} parent=5 // pred_check
      %p152 = pneg %p151
    $region22: #{ast_adapter_forward.12} parent=5 // pred_check_branch
      %154 = sbr.rel (%p152) target = $region24
    $region23: #{ast_adapter_forward.12} parent=5 // pred_region
      // Predicated region
      $region25: #{ast_adapter_forward.12} parent=23 // pred_check
        %p155 = pneg %p30
      $region26: #{ast_adapter_forward.12} parent=23 // pred_check_branch
        %157 = sbr.rel (%p155) target = $region28
      $region27: #{ast_adapter_forward.12} parent=23 // pred_region
        %p158 = scmp.lt.s32.totalorder %s10, 1
        %s159 = scalar_select %p158, %s10, 1
        %s160 = smul.addr %s159, 2
        %s161 = smul.addr %s160, 8
        %s162 = scalar_lea.vmem %s0, %s161
      $region28: #{ast_adapter_forward.12} parent=23 // pred_fallthru
        _
      // Predicated region
      $region29: #{ast_adapter_forward.12} parent=23 // pred_check
        %p163 = pneg %p98
      $region30: #{ast_adapter_forward.12} parent=23 // pred_check_branch
        %165 = sbr.rel (%p163) target = $region32
      $region31: #{ast_adapter_forward.12} parent=23 // pred_region
        %p166 = scmp.lt.s32.totalorder %s10, 1
        %s167 = scalar_select %p166, %s10, 1
        %s168 = smul.addr %s167, 2
        %s169 = smul.addr %s168, 8
        %s170 = scalar_lea.vmem %s3, %s169
      $region32: #{ast_adapter_forward.12} parent=23 // pred_fallthru
        _
    $region24: #{ast_adapter_forward.12} parent=5 // pred_fallthru
      _
    %p171 = scmp.le.s32.totalorder 1, %s10
    %p172 = scmp.lt.s32.totalorder %s10, 3
    %p173 = pnand %p171, %p172
    %p174 = pneg %p173
    // Predicated region
    $region33: #{ast_adapter_forward.12} parent=5 // pred_check
      _
    $region34: #{ast_adapter_forward.12} parent=5 // pred_check_branch
      %176 = sbr.rel (%p173) target = $region36
    $region35: #{ast_adapter_forward.12} parent=5 // pred_region
      %s177 = ssub.s32 %s10, 1
      %p178 = scmp.lt.s32.totalorder %s15, 1
      %s179 = scalar_select %p178, %s15, 1
      %s180 = smul.addr %s179, 2
      %s181 = smul.addr %s180, 8
      %s182 = scalar_lea.vmem %s0, %s181
      %p183 = pneg %p36
      %p184 = pneg %p33
      %p185 = pneg %p57
      %p186 = pneg %p54
      %p187 = pneg %p78
      %p188 = pneg %p75
      %p189 = scmp.lt.s32.totalorder %s15, 1
      %s190 = scalar_select %p189, %s15, 1
      %s191 = smul.addr %s190, 2
      %s192 = smul.addr %s191, 8
      %s193 = scalar_lea.vmem %s3, %s192
      %p194 = pneg %p104
      %p195 = pneg %p101
      %p196 = pneg %p130
      %p197 = pneg %p127
      %p198 = scmp.lt.s32.totalorder %s15, 1
      %s199 = scalar_select %p198, %s15, 1
      %s200 = smul.addr %s199, 2
      %s201 = smul.addr %s200, 8
      %s202 = scalar_lea.vmem %s4, %s201
      %p203 = scmp.lt.s32.totalorder %s15, 1
      %s204 = scalar_select %p203, %s15, 1
      %s205 = smul.addr %s204, 2
      %s206 = smul.addr %s205, 8
      %s207 = scalar_lea.vmem %s0, %s206
      %p208 = scmp.lt.s32.totalorder %s15, 1
      %s209 = scalar_select %p208, %s15, 1
      %s210 = smul.addr %s209, 2
      %s211 = smul.addr %s210, 8
      %s212 = scalar_lea.vmem %s3, %s211
      %p213 = scmp.lt.s32.totalorder %s15, 1
      %s214 = scalar_select %p213, %s15, 1
      %s215 = smul.addr %s214, 2
      %s216 = smul.addr %s215, 8
      %s217 = scalar_lea.vmem %s4, %s216
      %v219 = vld [vmem:[%s207] sm:$0xff]
      %v220 = vld [vmem:[%s207 + $0x8] sm:$0x7]
      %v221 = vmul.f32 %v219, 0.35355338
      %v222 = vmul.f32 %v220, 0.35355338
      %v223 = vpack.c.bf16 %v222, %v221
      %v224 = vpack.c.bf16 %v220, %v219
      %226 = vrot.lane.b32.xlu0 %v224, 96
      %v227 = vpop.permute.xlu0 %226
      %vm228 = vcmask 64512
      %v230 = vsel %vm228, %v223, 0
      %v233 = vsel %vm228, %v227, 0
      %235 = vmatprep.subr.bf16.mxu0 0
      %236 = vmatpush1.bf16.xpose.msra.mxu0 %v233
      %237 = vmatprep.subr.bf16.mxu0 0
      %238 = vmatpush1.bf16.xpose.msra.mxu0 0
      %239 = vmatprep.subr.bf16.mxu0 0
      %240 = vmatpush1.bf16.xpose.msra.mxu0 0
      %241 = vmatprep.subr.bf16.mxu0 0
      %242 = vmatpush1.bf16.xpose.msra.mxu0 0
      %243 = vmatprep.subr.bf16.mxu0 0
      %244 = vmatpush1.bf16.xpose.msra.mxu0 0
      %245 = vmatprep.subr.bf16.mxu0 0
      %246 = vmatpush1.bf16.xpose.msra.mxu0 0
      %247 = vmatprep.subr.bf16.mxu0 0
      %248 = vmatpush1.bf16.xpose.msra.mxu0 0
      %249 = vmatprep.subr.bf16.mxu0 0
      %250 = vmatpush1.bf16.xpose.msra.mxu0 0
      %251 = vmatprep.subr.bf16.mxu0 0
      %252 = vmatpush1.bf16.xpose.msra.mxu0 0
      %253 = vmatprep.subr.bf16.mxu0 0
      %254 = vmatpush1.bf16.xpose.msra.mxu0 0
      %255 = vmatprep.subr.bf16.mxu0 0
      %256 = vmatpush1.bf16.xpose.msra.mxu0 0
      %257 = vmatprep.subr.bf16.mxu0 0
      %258 = vmatpush1.bf16.xpose.msra.mxu0 0
      %259 = vmatprep.subr.bf16.mxu0 0
      %260 = vmatpush1.bf16.xpose.msra.mxu0 0
      %261 = vmatprep.subr.bf16.mxu0 0
      %262 = vmatpush1.bf16.xpose.msra.mxu0 0
      %263 = vmatprep.subr.bf16.mxu0 0
      %264 = vmatpush1.bf16.xpose.msra.mxu0 0
      %265 = vmatprep.subr.bf16.mxu0 0
      %266 = vmatpush1.bf16.xpose.msra.mxu0 0
      %267 = vmatprep.mubr.bf16.mxu0 0
      %268 = vmatmul.mubr.bf16.gmra.mrb[0].mxu0 %v230
      %v269 = vpop.f32.mrb[0].mxu0
      %v270 = vadd.f32 0.0, %v269
      %v271 = vpop.f32.mrb[0].mxu0
      %v272 = vpop.f32.mrb[0].mxu0
      %v273 = vadd.f32 0.0, %v272
      %v274 = vpop.f32.mrb[0].mxu0
      %275 = vdwg.mxu0
      %vm276 = vcmask 89088
      %v277 = vsel %vm276, %v270, -inf
      %278 = vmax.xlane.f32.xlu0 %v277
      %v279 = vpop.xlane.xlu0 %278
      %vm280 = vcmask 83968
      %v281 = vsel %vm280, %v273, -inf
      %282 = vmax.xlane.f32.xlu0 %v281
      %v283 = vpop.xlane.xlu0 %282
      %v284 = vsub.f32 %v270, %v279
      %v285 = vsub.f32 %v273, %v283
      %v286 = vmul.f32 %v284, 1.442695
      %v287 = vpow.pop %v286
      %v288 = vmul.f32 %v285, 1.442695
      %v289 = vpow.pop %v288
      %v290 = vsel %vm276, %v287, 0.0
      %291 = vadd.xlane.f32.xlu0 %v290
      %v292 = vpop.xlane.xlu0 %291
      %v293 = vsel %vm280, %v289, 0.0
      %294 = vadd.xlane.f32.xlu0 %v293
      %v295 = vpop.xlane.xlu0 %294
      %v296 = vrcp.pop %v292
      %v297 = vrcp.pop %v295
      %v298 = vmul.f32 %v287, %v296
      %v299 = vmul.f32 %v289, %v297
      %v300 = vpack.c.bf16 %v299, %v298
      %301 = vrot.lane.b32.xlu0 %v224, 64
      %v302 = vpop.permute.xlu0 %301
      %v304 = vsel %vm276, %v300, 0
      %vm306 = vcmask 1044480
      %vm307 = vcmask 1045504
      %v308 = vsel %vm306, 4294967295, 65535
      %v309 = vsel %vm307, %v308, 0
      %v311 = vand.u32 %v302, %v309
      %313 = vmatprep.subr.bf16.mxu0 0
      %314 = vmatpush1.bf16.msra.mxu0 %v311
      %315 = vmatprep.subr.bf16.mxu0 0
      %316 = vmatpush1.bf16.msra.mxu0 0
      %317 = vmatprep.subr.bf16.mxu0 0
      %318 = vmatpush1.bf16.msra.mxu0 0
      %319 = vmatprep.subr.bf16.mxu0 0
      %320 = vmatpush1.bf16.msra.mxu0 0
      %321 = vmatprep.subr.bf16.mxu0 0
      %322 = vmatpush1.bf16.msra.mxu0 0
      %323 = vmatprep.subr.bf16.mxu0 0
      %324 = vmatpush1.bf16.msra.mxu0 0
      %325 = vmatprep.subr.bf16.mxu0 0
      %326 = vmatpush1.bf16.msra.mxu0 0
      %327 = vmatprep.subr.bf16.mxu0 0
      %328 = vmatpush1.bf16.msra.mxu0 0
      %329 = vmatprep.subr.bf16.mxu0 0
      %330 = vmatpush1.bf16.msra.mxu0 0
      %331 = vmatprep.subr.bf16.mxu0 0
      %332 = vmatpush1.bf16.msra.mxu0 0
      %333 = vmatprep.subr.bf16.mxu0 0
      %334 = vmatpush1.bf16.msra.mxu0 0
      %335 = vmatprep.subr.bf16.mxu0 0
      %336 = vmatpush1.bf16.msra.mxu0 0
      %337 = vmatprep.subr.bf16.mxu0 0
      %338 = vmatpush1.bf16.msra.mxu0 0
      %339 = vmatprep.subr.bf16.mxu0 0
      %340 = vmatpush1.bf16.msra.mxu0 0
      %341 = vmatprep.subr.bf16.mxu0 0
      %342 = vmatpush1.bf16.msra.mxu0 0
      %343 = vmatprep.subr.bf16.mxu0 0
      %344 = vmatpush1.bf16.msra.mxu0 0
      %345 = vmatprep.mubr.bf16.mxu0 0
      %346 = vmatmul.mubr.bf16.gmra.mrb[0].mxu0 %v304
      %v347 = vpop.f32.mrb[0].mxu0
      %v348 = vadd.f32 0.0, %v347
      %v349 = vpop.f32.mrb[0].mxu0
      %v350 = vpop.f32.mrb[0].mxu0
      %v351 = vadd.f32 0.0, %v350
      %v352 = vpop.f32.mrb[0].mxu0
      %353 = vdwg.mxu0
      %355 = vrot.lane.b32.xlu0 %v223, 120
      %v356 = vpop.permute.xlu0 %355
      %357 = vrot.lane.b32.xlu0 %v224, 88
      %v358 = vpop.permute.xlu0 %357
      %v360 = vsel %vm228, %v356, 0
      %v363 = vsel %vm228, %v358, 0
      %365 = vmatprep.subr.bf16.mxu0 0
      %366 = vmatpush1.bf16.xpose.msra.mxu0 %v363
      %367 = vmatprep.subr.bf16.mxu0 0
      %368 = vmatpush1.bf16.xpose.msra.mxu0 0
      %369 = vmatprep.subr.bf16.mxu0 0
      %370 = vmatpush1.bf16.xpose.msra.mxu0 0
      %371 = vmatprep.subr.bf16.mxu0 0
      %372 = vmatpush1.bf16.xpose.msra.mxu0 0
      %373 = vmatprep.subr.bf16.mxu0 0
      %374 = vmatpush1.bf16.xpose.msra.mxu0 0
      %375 = vmatprep.subr.bf16.mxu0 0
      %376 = vmatpush1.bf16.xpose.msra.mxu0 0
      %377 = vmatprep.subr.bf16.mxu0 0
      %378 = vmatpush1.bf16.xpose.msra.mxu0 0
      %379 = vmatprep.subr.bf16.mxu0 0
      %380 = vmatpush1.bf16.xpose.msra.mxu0 0
      %381 = vmatprep.subr.bf16.mxu0 0
      %382 = vmatpush1.bf16.xpose.msra.mxu0 0
      %383 = vmatprep.subr.bf16.mxu0 0
      %384 = vmatpush1.bf16.xpose.msra.mxu0 0
      %385 = vmatprep.subr.bf16.mxu0 0
      %386 = vmatpush1.bf16.xpose.msra.mxu0 0
      %387 = vmatprep.subr.bf16.mxu0 0
      %388 = vmatpush1.bf16.xpose.msra.mxu0 0
      %389 = vmatprep.subr.bf16.mxu0 0
      %390 = vmatpush1.bf16.xpose.msra.mxu0 0
      %391 = vmatprep.subr.bf16.mxu0 0
      %392 = vmatpush1.bf16.xpose.msra.mxu0 0
      %393 = vmatprep.subr.bf16.mxu0 0
      %394 = vmatpush1.bf16.xpose.msra.mxu0 0
      %395 = vmatprep.subr.bf16.mxu0 0
      %396 = vmatpush1.bf16.xpose.msra.mxu0 0
      %397 = vmatprep.mubr.bf16.mxu0 0
      %398 = vmatmul.mubr.bf16.gmra.mrb[0].mxu0 %v360
      %v399 = vpop.f32.mrb[0].mxu0
      %v400 = vadd.f32 0.0, %v399
      %v401 = vpop.f32.mrb[0].mxu0
      %v402 = vpop.f32.mrb[0].mxu0
      %v403 = vadd.f32 0.0, %v402
      %v404 = vpop.f32.mrb[0].mxu0
      %405 = vdwg.mxu0
      %v406 = vsel %vm276, %v400, -inf
      %407 = vmax.xlane.f32.xlu0 %v406
      %v408 = vpop.xlane.xlu0 %407
      %v409 = vsel %vm280, %v403, -inf
      %410 = vmax.xlane.f32.xlu0 %v409
      %v411 = vpop.xlane.xlu0 %410
      %v412 = vsub.f32 %v400, %v408
      %v413 = vsub.f32 %v403, %v411
      %v414 = vmul.f32 %v412, 1.442695
      %v415 = vpow.pop %v414
      %v416 = vmul.f32 %v413, 1.442695
      %v417 = vpow.pop %v416
      %v418 = vsel %vm276, %v415, 0.0
      %419 = vadd.xlane.f32.xlu0 %v418
      %v420 = vpop.xlane.xlu0 %419
      %v421 = vsel %vm280, %v417, 0.0
      %422 = vadd.xlane.f32.xlu0 %v421
      %v423 = vpop.xlane.xlu0 %422
      %v424 = vrcp.pop %v420
      %v425 = vrcp.pop %v423
      %v426 = vmul.f32 %v415, %v424
      %v427 = vmul.f32 %v417, %v425
      %v428 = vpack.c.bf16 %v427, %v426
      %429 = vrot.lane.b32.xlu0 %v224, 56
      %v430 = vpop.permute.xlu0 %429
      %v432 = vsel %vm276, %v428, 0
      %v435 = vand.u32 %v430, %v309
      %437 = vmatprep.subr.bf16.mxu0 0
      %438 = vmatpush1.bf16.msra.mxu0 %v435
      %439 = vmatprep.subr.bf16.mxu0 0
      %440 = vmatpush1.bf16.msra.mxu0 0
      %441 = vmatprep.subr.bf16.mxu0 0
      %442 = vmatpush1.bf16.msra.mxu0 0
      %443 = vmatprep.subr.bf16.mxu0 0
      %444 = vmatpush1.bf16.msra.mxu0 0
      %445 = vmatprep.subr.bf16.mxu0 0
      %446 = vmatpush1.bf16.msra.mxu0 0
      %447 = vmatprep.subr.bf16.mxu0 0
      %448 = vmatpush1.bf16.msra.mxu0 0
      %449 = vmatprep.subr.bf16.mxu0 0
      %450 = vmatpush1.bf16.msra.mxu0 0
      %451 = vmatprep.subr.bf16.mxu0 0
      %452 = vmatpush1.bf16.msra.mxu0 0
      %453 = vmatprep.subr.bf16.mxu0 0
      %454 = vmatpush1.bf16.msra.mxu0 0
      %455 = vmatprep.subr.bf16.mxu0 0
      %456 = vmatpush1.bf16.msra.mxu0 0
      %457 = vmatprep.subr.bf16.mxu0 0
      %458 = vmatpush1.bf16.msra.mxu0 0
      %459 = vmatprep.subr.bf16.mxu0 0
      %460 = vmatpush1.bf16.msra.mxu0 0
      %461 = vmatprep.subr.bf16.mxu0 0
      %462 = vmatpush1.bf16.msra.mxu0 0
      %463 = vmatprep.subr.bf16.mxu0 0
      %464 = vmatpush1.bf16.msra.mxu0 0
      %465 = vmatprep.subr.bf16.mxu0 0
      %466 = vmatpush1.bf16.msra.mxu0 0
      %467 = vmatprep.subr.bf16.mxu0 0
      %468 = vmatpush1.bf16.msra.mxu0 0
      %469 = vmatprep.mubr.bf16.mxu0 0
      %470 = vmatmul.mubr.bf16.gmra.mrb[0].mxu0 %v432
      %v471 = vpop.f32.mrb[0].mxu0
      %v472 = vadd.f32 0.0, %v471
      %v473 = vpop.f32.mrb[0].mxu0
      %v474 = vpop.f32.mrb[0].mxu0
      %v475 = vadd.f32 0.0, %v474
      %v476 = vpop.f32.mrb[0].mxu0
      %477 = vdwg.mxu0
      %478 = vrot.lane.b32.xlu0 %v223, 112
      %v479 = vpop.permute.xlu0 %478
      %480 = vrot.lane.b32.xlu0 %v224, 80
      %v481 = vpop.permute.xlu0 %480
      %v483 = vsel %vm228, %v479, 0
      %v486 = vsel %vm228, %v481, 0
      %488 = vmatprep.subr.bf16.mxu0 0
      %489 = vmatpush1.bf16.xpose.msra.mxu0 %v486
      %490 = vmatprep.subr.bf16.mxu0 0
      %491 = vmatpush1.bf16.xpose.msra.mxu0 0
      %492 = vmatprep.subr.bf16.mxu0 0
      %493 = vmatpush1.bf16.xpose.msra.mxu0 0
      %494 = vmatprep.subr.bf16.mxu0 0
      %495 = vmatpush1.bf16.xpose.msra.mxu0 0
      %496 = vmatprep.subr.bf16.mxu0 0
      %497 = vmatpush1.bf16.xpose.msra.mxu0 0
      %498 = vmatprep.subr.bf16.mxu0 0
      %499 = vmatpush1.bf16.xpose.msra.mxu0 0
      %500 = vmatprep.subr.bf16.mxu0 0
      %501 = vmatpush1.bf16.xpose.msra.mxu0 0
      %502 = vmatprep.subr.bf16.mxu0 0
      %503 = vmatpush1.bf16.xpose.msra.mxu0 0
      %504 = vmatprep.subr.bf16.mxu0 0
      %505 = vmatpush1.bf16.xpose.msra.mxu0 0
      %506 = vmatprep.subr.bf16.mxu0 0
      %507 = vmatpush1.bf16.xpose.msra.mxu0 0
      %508 = vmatprep.subr.bf16.mxu0 0
      %509 = vmatpush1.bf16.xpose.msra.mxu0 0
      %510 = vmatprep.subr.bf16.mxu0 0
      %511 = vmatpush1.bf16.xpose.msra.mxu0 0
      %512 = vmatprep.subr.bf16.mxu0 0
      %513 = vmatpush1.bf16.xpose.msra.mxu0 0
      %514 = vmatprep.subr.bf16.mxu0 0
      %515 = vmatpush1.bf16.xpose.msra.mxu0 0
      %516 = vmatprep.subr.bf16.mxu0 0
      %517 = vmatpush1.bf16.xpose.msra.mxu0 0
      %518 = vmatprep.subr.bf16.mxu0 0
      %519 = vmatpush1.bf16.xpose.msra.mxu0 0
      %520 = vmatprep.mubr.bf16.mxu0 0
      %521 = vmatmul.mubr.bf16.gmra.mrb[0].mxu0 %v483
      %v522 = vpop.f32.mrb[0].mxu0
      %v523 = vadd.f32 0.0, %v522
      %v524 = vpop.f32.mrb[0].mxu0
      %v525 = vpop.f32.mrb[0].mxu0
      %v526 = vadd.f32 0.0, %v525
      %v527 = vpop.f32.mrb[0].mxu0
      %528 = vdwg.mxu0
      %v529 = vsel %vm276, %v523, -inf
      %530 = vmax.xlane.f32.xlu0 %v529
      %v531 = vpop.xlane.xlu0 %530
      %v532 = vsel %vm280, %v526, -inf
      %533 = vmax.xlane.f32.xlu0 %v532
      %v534 = vpop.xlane.xlu0 %533
      %v535 = vsub.f32 %v523, %v531
      %v536 = vsub.f32 %v526, %v534
      %v537 = vmul.f32 %v535, 1.442695
      %v538 = vpow.pop %v537
      %v539 = vmul.f32 %v536, 1.442695
      %v540 = vpow.pop %v539
      %v541 = vsel %vm276, %v538, 0.0
      %542 = vadd.xlane.f32.xlu0 %v541
      %v543 = vpop.xlane.xlu0 %542
      %v544 = vsel %vm280, %v540, 0.0
      %545 = vadd.xlane.f32.xlu0 %v544
      %v546 = vpop.xlane.xlu0 %545
      %v547 = vrcp.pop %v543
      %v548 = vrcp.pop %v546
      %v549 = vmul.f32 %v538, %v547
      %v550 = vmul.f32 %v540, %v548
      %v551 = vpack.c.bf16 %v550, %v549
      %552 = vrot.lane.b32.xlu0 %v224, 48
      %v553 = vpop.permute.xlu0 %552
      %v555 = vsel %vm276, %v551, 0
      %v558 = vand.u32 %v553, %v309
      %560 = vmatprep.subr.bf16.mxu0 0
      %561 = vmatpush1.bf16.msra.mxu0 %v558
      %562 = vmatprep.subr.bf16.mxu0 0
      %563 = vmatpush1.bf16.msra.mxu0 0
      %564 = vmatprep.subr.bf16.mxu0 0
      %565 = vmatpush1.bf16.msra.mxu0 0
      %566 = vmatprep.subr.bf16.mxu0 0
      %567 = vmatpush1.bf16.msra.mxu0 0
      %568 = vmatprep.subr.bf16.mxu0 0
      %569 = vmatpush1.bf16.msra.mxu0 0
      %570 = vmatprep.subr.bf16.mxu0 0
      %571 = vmatpush1.bf16.msra.mxu0 0
      %572 = vmatprep.subr.bf16.mxu0 0
      %573 = vmatpush1.bf16.msra.mxu0 0
      %574 = vmatprep.subr.bf16.mxu0 0
      %575 = vmatpush1.bf16.msra.mxu0 0
      %576 = vmatprep.subr.bf16.mxu0 0
      %577 = vmatpush1.bf16.msra.mxu0 0
      %578 = vmatprep.subr.bf16.mxu0 0
      %579 = vmatpush1.bf16.msra.mxu0 0
      %580 = vmatprep.subr.bf16.mxu0 0
      %581 = vmatpush1.bf16.msra.mxu0 0
      %582 = vmatprep.subr.bf16.mxu0 0
      %583 = vmatpush1.bf16.msra.mxu0 0
      %584 = vmatprep.subr.bf16.mxu0 0
      %585 = vmatpush1.bf16.msra.mxu0 0
      %586 = vmatprep.subr.bf16.mxu0 0
      %587 = vmatpush1.bf16.msra.mxu0 0
      %588 = vmatprep.subr.bf16.mxu0 0
      %589 = vmatpush1.bf16.msra.mxu0 0
      %590 = vmatprep.subr.bf16.mxu0 0
      %591 = vmatpush1.bf16.msra.mxu0 0
      %592 = vmatprep.mubr.bf16.mxu0 0
      %593 = vmatmul.mubr.bf16.gmra.mrb[0].mxu0 %v555
      %v594 = vpop.f32.mrb[0].mxu0
      %v595 = vadd.f32 0.0, %v594
      %v596 = vpop.f32.mrb[0].mxu0
      %v597 = vpop.f32.mrb[0].mxu0
      %v598 = vadd.f32 0.0, %v597
      %v599 = vpop.f32.mrb[0].mxu0
      %600 = vdwg.mxu0
      %601 = vrot.lane.b32.xlu0 %v223, 104
      %v602 = vpop.permute.xlu0 %601
      %603 = vrot.lane.b32.xlu0 %v224, 72
      %v604 = vpop.permute.xlu0 %603
      %v606 = vsel %vm228, %v602, 0
      %v609 = vsel %vm228, %v604, 0
      %611 = vmatprep.subr.bf16.mxu0 0
      %612 = vmatpush1.bf16.xpose.msra.mxu0 %v609
      %613 = vmatprep.subr.bf16.mxu0 0
      %614 = vmatpush1.bf16.xpose.msra.mxu0 0
      %615 = vmatprep.subr.bf16.mxu0 0
      %616 = vmatpush1.bf16.xpose.msra.mxu0 0
      %617 = vmatprep.subr.bf16.mxu0 0
      %618 = vmatpush1.bf16.xpose.msra.mxu0 0
      %619 = vmatprep.subr.bf16.mxu0 0
      %620 = vmatpush1.bf16.xpose.msra.mxu0 0
      %621 = vmatprep.subr.bf16.mxu0 0
      %622 = vmatpush1.bf16.xpose.msra.mxu0 0
      %623 = vmatprep.subr.bf16.mxu0 0
      %624 = vmatpush1.bf16.xpose.msra.mxu0 0
      %625 = vmatprep.subr.bf16.mxu0 0
      %626 = vmatpush1.bf16.xpose.msra.mxu0 0
      %627 = vmatprep.subr.bf16.mxu0 0
      %628 = vmatpush1.bf16.xpose.msra.mxu0 0
      %629 = vmatprep.subr.bf16.mxu0 0
      %630 = vmatpush1.bf16.xpose.msra.mxu0 0
      %631 = vmatprep.subr.bf16.mxu0 0
      %632 = vmatpush1.bf16.xpose.msra.mxu0 0
      %633 = vmatprep.subr.bf16.mxu0 0
      %634 = vmatpush1.bf16.xpose.msra.mxu0 0
      %635 = vmatprep.subr.bf16.mxu0 0
      %636 = vmatpush1.bf16.xpose.msra.mxu0 0
      %637 = vmatprep.subr.bf16.mxu0 0
      %638 = vmatpush1.bf16.xpose.msra.mxu0 0
      %639 = vmatprep.subr.bf16.mxu0 0
      %640 = vmatpush1.bf16.xpose.msra.mxu0 0
      %641 = vmatprep.subr.bf16.mxu0 0
      %642 = vmatpush1.bf16.xpose.msra.mxu0 0
      %643 = vmatprep.mubr.bf16.mxu0 0
      %644 = vmatmul.mubr.bf16.gmra.mrb[0].mxu0 %v606
      %v645 = vpop.f32.mrb[0].mxu0
      %v646 = vadd.f32 0.0, %v645
      %v647 = vpop.f32.mrb[0].mxu0
      %v648 = vpop.f32.mrb[0].mxu0
      %v649 = vadd.f32 0.0, %v648
      %v650 = vpop.f32.mrb[0].mxu0
      %651 = vdwg.mxu0
      %v652 = vsel %vm276, %v646, -inf
      %653 = vmax.xlane.f32.xlu0 %v652
      %v654 = vpop.xlane.xlu0 %653
      %v655 = vsel %vm280, %v649, -inf
      %656 = vmax.xlane.f32.xlu0 %v655
      %v657 = vpop.xlane.xlu0 %656
      %v658 = vsub.f32 %v646, %v654
      %v659 = vsub.f32 %v649, %v657
      %v660 = vmul.f32 %v658, 1.442695
      %v661 = vpow.pop %v660
      %v662 = vmul.f32 %v659, 1.442695
      %v663 = vpow.pop %v662
      %v664 = vsel %vm276, %v661, 0.0
      %665 = vadd.xlane.f32.xlu0 %v664
      %v666 = vpop.xlane.xlu0 %665
      %v667 = vsel %vm280, %v663, 0.0
      %668 = vadd.xlane.f32.xlu0 %v667
      %v669 = vpop.xlane.xlu0 %668
      %v670 = vrcp.pop %v666
      %v671 = vrcp.pop %v669
      %v672 = vmul.f32 %v661, %v670
      %v673 = vmul.f32 %v663, %v671
      %v674 = vpack.c.bf16 %v673, %v672
      %675 = vrot.lane.b32.xlu0 %v224, 40
      %v676 = vpop.permute.xlu0 %675
      %v678 = vsel %vm276, %v674, 0
      %v681 = vand.u32 %v676, %v309
      %683 = vmatprep.subr.bf16.mxu0 0
      %684 = vmatpush1.bf16.msra.mxu0 %v681
      %685 = vmatprep.subr.bf16.mxu0 0
      %686 = vmatpush1.bf16.msra.mxu0 0
      %687 = vmatprep.subr.bf16.mxu0 0
      %688 = vmatpush1.bf16.msra.mxu0 0
      %689 = vmatprep.subr.bf16.mxu0 0
      %690 = vmatpush1.bf16.msra.mxu0 0
      %691 = vmatprep.subr.bf16.mxu0 0
      %692 = vmatpush1.bf16.msra.mxu0 0
      %693 = vmatprep.subr.bf16.mxu0 0
      %694 = vmatpush1.bf16.msra.mxu0 0
      %695 = vmatprep.subr.bf16.mxu0 0
      %696 = vmatpush1.bf16.msra.mxu0 0
      %697 = vmatprep.subr.bf16.mxu0 0
      %698 = vmatpush1.bf16.msra.mxu0 0
      %699 = vmatprep.subr.bf16.mxu0 0
      %700 = vmatpush1.bf16.msra.mxu0 0
      %701 = vmatprep.subr.bf16.mxu0 0
      %702 = vmatpush1.bf16.msra.mxu0 0
      %703 = vmatprep.subr.bf16.mxu0 0
      %704 = vmatpush1.bf16.msra.mxu0 0
      %705 = vmatprep.subr.bf16.mxu0 0
      %706 = vmatpush1.bf16.msra.mxu0 0
      %707 = vmatprep.subr.bf16.mxu0 0
      %708 = vmatpush1.bf16.msra.mxu0 0
      %709 = vmatprep.subr.bf16.mxu0 0
      %710 = vmatpush1.bf16.msra.mxu0 0
      %711 = vmatprep.subr.bf16.mxu0 0
      %712 = vmatpush1.bf16.msra.mxu0 0
      %713 = vmatprep.subr.bf16.mxu0 0
      %714 = vmatpush1.bf16.msra.mxu0 0
      %715 = vmatprep.mubr.bf16.mxu0 0
      %716 = vmatmul.mubr.bf16.gmra.mrb[0].mxu0 %v678
      %v717 = vpop.f32.mrb[0].mxu0
      %v718 = vadd.f32 0.0, %v717
      %v719 = vpop.f32.mrb[0].mxu0
      %v720 = vpop.f32.mrb[0].mxu0
      %v721 = vadd.f32 0.0, %v720
      %v722 = vpop.f32.mrb[0].mxu0
      %723 = vdwg.mxu0
      %726 = vrot.lane.b32.xlu0 %v472, 8
      %v727 = vpop.permute.xlu0 %726
      %728 = vrot.lane.b32.xlu0 %v475, 8
      %v729 = vpop.permute.xlu0 %728
      %734 = vrot.lane.b32.xlu0 %v595, 16
      %v735 = vpop.permute.xlu0 %734
      %736 = vrot.lane.b32.xlu0 %v598, 16
      %v737 = vpop.permute.xlu0 %736
      %742 = vrot.lane.b32.xlu0 %v718, 24
      %v743 = vpop.permute.xlu0 %742
      %744 = vrot.lane.b32.xlu0 %v721, 24
      %v745 = vpop.permute.xlu0 %744
      %v748 = vsel %vm228, %v348, %v727
      %v749 = vsel %vm228, %v351, %v729
      %vm750 = vcmask 130048
      %v751 = vsel %vm750, %v748, %v735
      %v752 = vsel %vm750, %v749, %v737
      %vm753 = vcmask 195584
      %v754 = vsel %vm753, %v751, %v743
      %v755 = vsel %vm753, %v752, %v745
      %v756 = vpack.c.bf16 %v755, %v754
      %v757 = vld [vmem:[%s1] sm:$0xf]
      %v758 = vld [vmem:[%s1 + $0x4] sm:$0xf]
      %v759 = vld [vmem:[%s1 + $0x8] sm:$0xf]
      %v760 = vld [vmem:[%s1 + $0xc] sm:$0xf]
      %v761 = vld [vmem:[%s2] sm:$0x1]
      %v763 = vlaneseq
      %v764 = vshrl.u32 %v763, 7
      %v765 = vsub.s32 0, %v764
      %v766 = vrot.slane %v761, %v765
      %v772 = vunpack.c.l.b16 %v757
      %v773 = vunpack.c.l.b16 %v758
      %v774 = vunpack.c.l.b16 %v759
      %v775 = vunpack.c.l.b16 %v760
      %v776 = vpack.c.b16 %v773, %v772
      %v777 = vpack.c.b16 %v775, %v774
      %vm780 = vcmask 261120
      %v782 = vsel %vm780, %v756, 0
      %784 = vmatprep.subr.bf16.mxu0 0
      %785 = vmatpush1.bf16.msra.mxu0 %v776
      %786 = vmatprep.subr.bf16.mxu0 0
      %787 = vmatpush1.bf16.msra.mxu0 %v777
      %788 = vmatprep.subr.bf16.mxu0 0
      %789 = vmatpush1.bf16.msra.mxu0 0
      %790 = vmatprep.subr.bf16.mxu0 0
      %791 = vmatpush1.bf16.msra.mxu0 0
      %792 = vmatprep.subr.bf16.mxu0 0
      %793 = vmatpush1.bf16.msra.mxu0 0
      %794 = vmatprep.subr.bf16.mxu0 0
      %795 = vmatpush1.bf16.msra.mxu0 0
      %796 = vmatprep.subr.bf16.mxu0 0
      %797 = vmatpush1.bf16.msra.mxu0 0
      %798 = vmatprep.subr.bf16.mxu0 0
      %799 = vmatpush1.bf16.msra.mxu0 0
      %800 = vmatprep.subr.bf16.mxu0 0
      %801 = vmatpush1.bf16.msra.mxu0 0
      %802 = vmatprep.subr.bf16.mxu0 0
      %803 = vmatpush1.bf16.msra.mxu0 0
      %804 = vmatprep.subr.bf16.mxu0 0
      %805 = vmatpush1.bf16.msra.mxu0 0
      %806 = vmatprep.subr.bf16.mxu0 0
      %807 = vmatpush1.bf16.msra.mxu0 0
      %808 = vmatprep.subr.bf16.mxu0 0
      %809 = vmatpush1.bf16.msra.mxu0 0
      %810 = vmatprep.subr.bf16.mxu0 0
      %811 = vmatpush1.bf16.msra.mxu0 0
      %812 = vmatprep.subr.bf16.mxu0 0
      %813 = vmatpush1.bf16.msra.mxu0 0
      %814 = vmatprep.subr.bf16.mxu0 0
      %815 = vmatpush1.bf16.msra.mxu0 0
      %816 = vmatprep.mubr.bf16.mxu0 0
      %817 = vmatmul.mubr.bf16.gmra.mrb[0].mxu0 %v782
      %v818 = vpop.f32.mrb[0].mxu0
      %v819 = vadd.f32 %v766, %v818
      %v820 = vpop.f32.mrb[0].mxu0
      %v821 = vpop.f32.mrb[0].mxu0
      %v822 = vadd.f32 %v766, %v821
      %v823 = vpop.f32.mrb[0].mxu0
      %824 = vdwg.mxu0
      %v825 = vld [vmem:[%s212] sm:$0xff]
      %v826 = vld [vmem:[%s212 + $0x8] sm:$0x7]
      %v827 = vadd.f32 %v819, %v825
      %v828 = vadd.f32 %v822, %v826
      %829 = vst.msk [vmem:[%s217] sm:$0xff] %vm780, %v827
      %vm830 = vcmask 256000
      %831 = vst.msk [vmem:[%s217 + $0x8] sm:$0x7] %vm830, %v828
      %p832 = scmp.lt.s32.totalorder %s15, 1
      %s833 = scalar_select %p832, %s15, 1
      %s834 = smul.addr %s833, 2
      %s835 = smul.addr %s834, 8
      %s836 = scalar_lea.vmem %s4, %s835
      // Predicated region
      $region37: #{ast_adapter_forward.12} parent=35 // pred_check
        %p837 = pneg %p127
      $region38: #{ast_adapter_forward.12} parent=35 // pred_check_branch
        %839 = sbr.rel (%p837) target = $region40
      $region39: #{ast_adapter_forward.12} parent=35 // pred_region
        _
      $region40: #{ast_adapter_forward.12} parent=35 // pred_fallthru
        _
    $region36: #{ast_adapter_forward.12} parent=5 // pred_fallthru
      _
    %p840 = scmp.le.s32.totalorder 2, %s10
    // Predicated region
    $region41: #{ast_adapter_forward.12} parent=5 // pred_check
      %p841 = pneg %p840
    $region42: #{ast_adapter_forward.12} parent=5 // pred_check_branch
      %843 = sbr.rel (%p841) target = $region44
    $region43: #{ast_adapter_forward.12} parent=5 // pred_region
      %s844 = ssub.s32 %s10, 2
      // Predicated region
      $region45: #{ast_adapter_forward.12} parent=43 // pred_check
        %p845 = pneg %p133
      $region46: #{ast_adapter_forward.12} parent=43 // pred_check_branch
        %847 = sbr.rel (%p845) target = $region48
      $region47: #{ast_adapter_forward.12} parent=43 // pred_region
        %p848 = scmp.lt.s32.totalorder %s16, 1
        %s849 = scalar_select %p848, %s16, 1
        %s850 = smul.addr %s849, 2
        %s851 = smul.addr %s850, 8
        %s852 = scalar_lea.vmem %s4, %s851
      $region48: #{ast_adapter_forward.12} parent=43 // pred_fallthru
        _
    $region44: #{ast_adapter_forward.12} parent=5 // pred_fallthru
      _
  $region6: #{ast_adapter_forward.12} parent=0 // loop_footer
    %s14 = sadd.s32 1, %s10
  $region7: #{ast_adapter_forward.12} parent=0 // loop_footer_branch
    %9 = sbr.rel target = $region3
  $region8: #{ast_adapter_forward.12} parent=0 // loop_exit
    _

// kernel: ast_adapter_forward.14
$region0: #{ast_adapter_forward.14}
  #allocation0 [shape = 'u32[]', space=smem, size = 0x4, offset = 0x4, fixed_abs, tag = 'smem constant byte address 0x4 - core index']
  #allocation1 [shape = 'u32[144,128]{1,0:T(1,128)}', space=vmem, size = 0x12000, scoped, tag = 'internal scratch']
  %s0 = inlined_call_operand.vmem [shape: f32[22,64], index: 0, kind: input, shape index: {}]
  %s1 = inlined_call_operand.vmem [shape: bf16[64,32], index: 1, kind: input, shape index: {}]
  %s2 = inlined_call_operand.vmem [shape: f32[1,32], index: 2, kind: input, shape index: {}]
  %s3 = inlined_call_operand.vmem [shape: bf16[32,8], index: 3, kind: input, shape index: {}]
  %s4 = inlined_call_operand.vmem [shape: f32[1,8], index: 4, kind: input, shape index: {}]
  %s5 = inlined_call_operand.vmem [shape: bf16[8,32], index: 5, kind: input, shape index: {}]
  %s6 = inlined_call_operand.vmem [shape: f32[1,32], index: 6, kind: input, shape index: {}]
  %s7 = inlined_call_operand.vmem [shape: f32[22,32], index: 7, kind: input, shape index: {}]
  %s8 = inlined_call_operand.vmem [shape: f32[22,32], index: 8, kind: output, shape index: {}]
  %s9 = sld [smem:[#allocation0]]
  $region42: #{ast_adapter_forward.14} parent=0
    _
  %s11 = ssub.s32 1, %s9
  %s12 = scalar_select 0, %s11, %s9
  // Predicated region
  $region2: #{ast_adapter_forward.14} parent=0 // pred_check
    _
  $region3: #{ast_adapter_forward.14} parent=0 // pred_check_branch
    %14 = sbr.rel (0) target = $region5
  $region4: #{ast_adapter_forward.14} parent=0 // pred_region
    _
  $region5: #{ast_adapter_forward.14} parent=0 // pred_fallthru
    _
  // Predicated region
  $region6: #{ast_adapter_forward.14} parent=0 // pred_check
    _
  $region7: #{ast_adapter_forward.14} parent=0 // pred_check_branch
    %16 = sbr.rel (0) target = $region9
  $region8: #{ast_adapter_forward.14} parent=0 // pred_region
    _
  $region9: #{ast_adapter_forward.14} parent=0 // pred_fallthru
    _
  // Predicated region
  $region10: #{ast_adapter_forward.14} parent=0 // pred_check
    _
  $region11: #{ast_adapter_forward.14} parent=0 // pred_check_branch
    %18 = sbr.rel (0) target = $region13
  $region12: #{ast_adapter_forward.14} parent=0 // pred_region
    _
  $region13: #{ast_adapter_forward.14} parent=0 // pred_fallthru
    _
  // Predicated region
  $region14: #{ast_adapter_forward.14} parent=0 // pred_check
    _
  $region15: #{ast_adapter_forward.14} parent=0 // pred_check_branch
    %20 = sbr.rel (0) target = $region17
  $region16: #{ast_adapter_forward.14} parent=0 // pred_region
    _
  $region17: #{ast_adapter_forward.14} parent=0 // pred_fallthru
    _
  // Predicated region
  $region18: #{ast_adapter_forward.14} parent=0 // pred_check
    _
  $region19: #{ast_adapter_forward.14} parent=0 // pred_check_branch
    %22 = sbr.rel (0) target = $region21
  $region20: #{ast_adapter_forward.14} parent=0 // pred_region
    _
  $region21: #{ast_adapter_forward.14} parent=0 // pred_fallthru
    _
  // Predicated region
  $region22: #{ast_adapter_forward.14} parent=0 // pred_check
    _
  $region23: #{ast_adapter_forward.14} parent=0 // pred_check_branch
    %24 = sbr.rel (0) target = $region25
  $region24: #{ast_adapter_forward.14} parent=0 // pred_region
    _
  $region25: #{ast_adapter_forward.14} parent=0 // pred_fallthru
    _
  // Predicated region
  $region26: #{ast_adapter_forward.14} parent=0 // pred_check
    _
  $region27: #{ast_adapter_forward.14} parent=0 // pred_check_branch
    %26 = sbr.rel (0) target = $region29
  $region28: #{ast_adapter_forward.14} parent=0 // pred_region
    _
  $region29: #{ast_adapter_forward.14} parent=0 // pred_fallthru
    _
  // Predicated region
  $region30: #{ast_adapter_forward.14} parent=0 // pred_check
    _
  $region31: #{ast_adapter_forward.14} parent=0 // pred_check_branch
    %28 = sbr.rel (0) target = $region33
  $region32: #{ast_adapter_forward.14} parent=0 // pred_region
    _
  $region33: #{ast_adapter_forward.14} parent=0 // pred_fallthru
    _
  %v30 = vld [vmem:[%s0] sm:$0xff]
  %v31 = vld [vmem:[%s0 + $0x8] sm:$0xff]
  %v32 = vld [vmem:[%s0 + $0x10] sm:$0x3f]
  %v33 = vpack.c.bf16 %v31, %v30
  %v34 = vpack.c.bf16 %v32, %v32
  %v35 = vld [vmem:[%s1] sm:$0xf]
  %v36 = vld [vmem:[%s1 + $0x4] sm:$0xf]
  %v37 = vld [vmem:[%s1 + $0x8] sm:$0xf]
  %v38 = vld [vmem:[%s1 + $0xc] sm:$0xf]
  %v39 = vld [vmem:[%s1 + $0x10] sm:$0xf]
  %v40 = vld [vmem:[%s1 + $0x14] sm:$0xf]
  %v41 = vld [vmem:[%s1 + $0x18] sm:$0xf]
  %v42 = vld [vmem:[%s1 + $0x1c] sm:$0xf]
  %v43 = vld [vmem:[%s2] sm:$0x1]
  %v45 = vlaneseq
  %v46 = vshrl.u32 %v45, 7
  %v47 = vsub.s32 0, %v46
  %v48 = vrot.slane %v43, %v47
  %v58 = vunpack.c.l.b16 %v35
  %v59 = vunpack.c.l.b16 %v36
  %v60 = vunpack.c.l.b16 %v37
  %v61 = vunpack.c.l.b16 %v38
  %v62 = vunpack.c.l.b16 %v39
  %v63 = vunpack.c.l.b16 %v40
  %v64 = vunpack.c.l.b16 %v41
  %v65 = vunpack.c.l.b16 %v42
  %v66 = vpack.c.b16 %v59, %v58
  %v67 = vpack.c.b16 %v61, %v60
  %v68 = vpack.c.b16 %v63, %v62
  %v69 = vpack.c.b16 %v65, %v64
  %vm74 = vcmask 523264
  %v76 = vsel %vm74, %v33, 0
  %v79 = vsel %vm74, %v34, 0
  %81 = vmatprep.subr.bf16.mxu0 0
  %82 = vmatpush1.bf16.msra.mxu0 %v66
  %83 = vmatprep.subr.bf16.mxu0 0
  %84 = vmatpush1.bf16.msra.mxu0 %v67
  %85 = vmatprep.subr.bf16.mxu0 0
  %86 = vmatpush1.bf16.msra.mxu0 %v68
  %87 = vmatprep.subr.bf16.mxu0 0
  %88 = vmatpush1.bf16.msra.mxu0 %v69
  %89 = vmatprep.subr.bf16.mxu0 0
  %90 = vmatpush1.bf16.msra.mxu0 0
  %91 = vmatprep.subr.bf16.mxu0 0
  %92 = vmatpush1.bf16.msra.mxu0 0
  %93 = vmatprep.subr.bf16.mxu0 0
  %94 = vmatpush1.bf16.msra.mxu0 0
  %95 = vmatprep.subr.bf16.mxu0 0
  %96 = vmatpush1.bf16.msra.mxu0 0
  %97 = vmatprep.subr.bf16.mxu0 0
  %98 = vmatpush1.bf16.msra.mxu0 0
  %99 = vmatprep.subr.bf16.mxu0 0
  %100 = vmatpush1.bf16.msra.mxu0 0
  %101 = vmatprep.subr.bf16.mxu0 0
  %102 = vmatpush1.bf16.msra.mxu0 0
  %103 = vmatprep.subr.bf16.mxu0 0
  %104 = vmatpush1.bf16.msra.mxu0 0
  %105 = vmatprep.subr.bf16.mxu0 0
  %106 = vmatpush1.bf16.msra.mxu0 0
  %107 = vmatprep.subr.bf16.mxu0 0
  %108 = vmatpush1.bf16.msra.mxu0 0
  %109 = vmatprep.subr.bf16.mxu0 0
  %110 = vmatpush1.bf16.msra.mxu0 0
  %111 = vmatprep.subr.bf16.mxu0 0
  %112 = vmatpush1.bf16.msra.mxu0 0
  %113 = vmatprep.mubr.bf16.mxu0 0
  %114 = vmatmul.mubr.bf16.gmra.mrb[0].mxu0 %v76
  %v115 = vpop.f32.mrb[0].mxu0
  %v116 = vadd.f32 %v48, %v115
  %v117 = vpop.f32.mrb[0].mxu0
  %v118 = vpop.f32.mrb[0].mxu0
  %v119 = vadd.f32 %v48, %v118
  %v120 = vpop.f32.mrb[0].mxu0
  %121 = vmatprep.mubr.bf16.mxu0 0
  %122 = vmatmul.mubr.bf16.gmra.mrb[0].mxu0 %v79
  %v123 = vpop.f32.mrb[0].mxu0
  %v124 = vadd.f32 %v48, %v123
  %v125 = vpop.f32.mrb[0].mxu0
  %v126 = vpop.f32.mrb[0].mxu0
  %v127 = vpop.f32.mrb[0].mxu0
  %128 = vdwg.mxu0
  %v129 = vpack.c.bf16 %v119, %v116
  %v130 = vpack.c.bf16 %v124, %v124
  %v131 = vld [vmem:[%s3] sm:$0xf]
  %v132 = vld [vmem:[%s3 + $0x4] sm:$0xf]
  %v133 = vld [vmem:[%s3 + $0x8] sm:$0xf]
  %v134 = vld [vmem:[%s3 + $0xc] sm:$0xf]
  %v135 = vld [vmem:[%s4] sm:$0x1]
  %v137 = vlaneseq
  %v138 = vshrl.u32 %v137, 7
  %v139 = vsub.s32 0, %v138
  %v140 = vrot.slane %v135, %v139
  %v146 = vunpack.c.l.b16 %v131
  %v147 = vunpack.c.l.b16 %v132
  %v148 = vunpack.c.l.b16 %v133
  %v149 = vunpack.c.l.b16 %v134
  %v150 = vpack.c.b16 %v147, %v146
  %v151 = vpack.c.b16 %v149, %v148
  %vm154 = vcmask 261120
  %v156 = vsel %vm154, %v129, 0
  %v159 = vsel %vm154, %v130, 0
  %161 = vmatprep.subr.bf16.mxu0 0
  %162 = vmatpush1.bf16.msra.mxu0 %v150
  %163 = vmatprep.subr.bf16.mxu0 0
  %164 = vmatpush1.bf16.msra.mxu0 %v151
  %165 = vmatprep.subr.bf16.mxu0 0
  %166 = vmatpush1.bf16.msra.mxu0 0
  %167 = vmatprep.subr.bf16.mxu0 0
  %168 = vmatpush1.bf16.msra.mxu0 0
  %169 = vmatprep.subr.bf16.mxu0 0
  %170 = vmatpush1.bf16.msra.mxu0 0
  %171 = vmatprep.subr.bf16.mxu0 0
  %172 = vmatpush1.bf16.msra.mxu0 0
  %173 = vmatprep.subr.bf16.mxu0 0
  %174 = vmatpush1.bf16.msra.mxu0 0
  %175 = vmatprep.subr.bf16.mxu0 0
  %176 = vmatpush1.bf16.msra.mxu0 0
  %177 = vmatprep.subr.bf16.mxu0 0
  %178 = vmatpush1.bf16.msra.mxu0 0
  %179 = vmatprep.subr.bf16.mxu0 0
  %180 = vmatpush1.bf16.msra.mxu0 0
  %181 = vmatprep.subr.bf16.mxu0 0
  %182 = vmatpush1.bf16.msra.mxu0 0
  %183 = vmatprep.subr.bf16.mxu0 0
  %184 = vmatpush1.bf16.msra.mxu0 0
  %185 = vmatprep.subr.bf16.mxu0 0
  %186 = vmatpush1.bf16.msra.mxu0 0
  %187 = vmatprep.subr.bf16.mxu0 0
  %188 = vmatpush1.bf16.msra.mxu0 0
  %189 = vmatprep.subr.bf16.mxu0 0
  %190 = vmatpush1.bf16.msra.mxu0 0
  %191 = vmatprep.subr.bf16.mxu0 0
  %192 = vmatpush1.bf16.msra.mxu0 0
  %193 = vmatprep.mubr.bf16.mxu0 0
  %194 = vmatmul.mubr.bf16.gmra.mrb[0].mxu0 %v156
  %v195 = vpop.f32.mrb[0].mxu0
  %v196 = vadd.f32 %v140, %v195
  %v197 = vpop.f32.mrb[0].mxu0
  %v198 = vpop.f32.mrb[0].mxu0
  %v199 = vadd.f32 %v140, %v198
  %v200 = vpop.f32.mrb[0].mxu0
  %201 = vmatprep.mubr.bf16.mxu0 0
  %202 = vmatmul.mubr.bf16.gmra.mrb[0].mxu0 %v159
  %v203 = vpop.f32.mrb[0].mxu0
  %v204 = vadd.f32 %v140, %v203
  %v205 = vpop.f32.mrb[0].mxu0
  %v206 = vpop.f32.mrb[0].mxu0
  %v207 = vpop.f32.mrb[0].mxu0
  %208 = vdwg.mxu0
  %v209 = vmul.f32 %v196, %v196
  %v210 = vmul.f32 %v199, %v199
  %v211 = vmul.f32 %v204, %v204
  %v212 = vmul.f32 %v196, %v209
  %v213 = vmul.f32 %v199, %v210
  %v214 = vmul.f32 %v204, %v211
  %v215 = vmul.f32 %v212, 0.044715
  %v216 = vmul.f32 %v213, 0.044715
  %v217 = vmul.f32 %v214, 0.044715
  %v218 = vadd.f32 %v196, %v215
  %v219 = vadd.f32 %v199, %v216
  %v220 = vadd.f32 %v204, %v217
  %v221 = vmul.f32 %v218, 0.7978846
  %v222 = vmul.f32 %v219, 0.7978846
  %v223 = vmul.f32 %v220, 0.7978846
  %v224 = vtanh.pop %v221
  %v225 = vtanh.pop %v222
  %v226 = vtanh.pop %v223
  %v227 = vadd.f32 %v224, 1.0
  %v228 = vadd.f32 %v225, 1.0
  %v229 = vadd.f32 %v226, 1.0
  %v230 = vmul.f32 %v227, 0.5
  %v231 = vmul.f32 %v228, 0.5
  %v232 = vmul.f32 %v229, 0.5
  %v233 = vmul.f32 %v196, %v230
  %v234 = vmul.f32 %v199, %v231
  %v235 = vmul.f32 %v204, %v232
  %v236 = vpack.c.bf16 %v234, %v233
  %v237 = vpack.c.bf16 %v235, %v235
  %v238 = vld [vmem:[%s5] sm:$0xf]
  %v239 = vld [vmem:[%s6] sm:$0x1]
  %v241 = vlaneseq
  %v242 = vshrl.u32 %v241, 7
  %v243 = vsub.s32 0, %v242
  %v244 = vrot.slane %v239, %v243
  %vm246 = vcmask 64512
  %v248 = vsel %vm246, %v236, 0
  %v251 = vsel %vm246, %v237, 0
  %vm253 = vcmask 1043456
  %v255 = vsel %vm253, %v238, 0
  %257 = vmatprep.subr.bf16.mxu0 0
  %258 = vmatpush1.bf16.msra.mxu0 %v255
  %259 = vmatprep.subr.bf16.mxu0 0
  %260 = vmatpush1.bf16.msra.mxu0 0
  %261 = vmatprep.subr.bf16.mxu0 0
  %262 = vmatpush1.bf16.msra.mxu0 0
  %263 = vmatprep.subr.bf16.mxu0 0
  %264 = vmatpush1.bf16.msra.mxu0 0
  %265 = vmatprep.subr.bf16.mxu0 0
  %266 = vmatpush1.bf16.msra.mxu0 0
  %267 = vmatprep.subr.bf16.mxu0 0
  %268 = vmatpush1.bf16.msra.mxu0 0
  %269 = vmatprep.subr.bf16.mxu0 0
  %270 = vmatpush1.bf16.msra.mxu0 0
  %271 = vmatprep.subr.bf16.mxu0 0
  %272 = vmatpush1.bf16.msra.mxu0 0
  %273 = vmatprep.subr.bf16.mxu0 0
  %274 = vmatpush1.bf16.msra.mxu0 0
  %275 = vmatprep.subr.bf16.mxu0 0
  %276 = vmatpush1.bf16.msra.mxu0 0
  %277 = vmatprep.subr.bf16.mxu0 0
  %278 = vmatpush1.bf16.msra.mxu0 0
  %279 = vmatprep.subr.bf16.mxu0 0
  %280 = vmatpush1.bf16.msra.mxu0 0
  %281 = vmatprep.subr.bf16.mxu0 0
  %282 = vmatpush1.bf16.msra.mxu0 0
  %283 = vmatprep.subr.bf16.mxu0 0
  %284 = vmatpush1.bf16.msra.mxu0 0
  %285 = vmatprep.subr.bf16.mxu0 0
  %286 = vmatpush1.bf16.msra.mxu0 0
  %287 = vmatprep.subr.bf16.mxu0 0
  %288 = vmatpush1.bf16.msra.mxu0 0
  %289 = vmatprep.mubr.bf16.mxu0 0
  %290 = vmatmul.mubr.bf16.gmra.mrb[0].mxu0 %v248
  %v291 = vpop.f32.mrb[0].mxu0
  %v292 = vadd.f32 %v244, %v291
  %v293 = vpop.f32.mrb[0].mxu0
  %v294 = vpop.f32.mrb[0].mxu0
  %v295 = vadd.f32 %v244, %v294
  %v296 = vpop.f32.mrb[0].mxu0
  %297 = vmatprep.mubr.bf16.mxu0 0
  %298 = vmatmul.mubr.bf16.gmra.mrb[0].mxu0 %v251
  %v299 = vpop.f32.mrb[0].mxu0
  %v300 = vadd.f32 %v244, %v299
  %v301 = vpop.f32.mrb[0].mxu0
  %v302 = vpop.f32.mrb[0].mxu0
  %v303 = vpop.f32.mrb[0].mxu0
  %304 = vdwg.mxu0
  %v305 = vld [vmem:[%s7] sm:$0xff]
  %v306 = vld [vmem:[%s7 + $0x8] sm:$0xff]
  %v307 = vld [vmem:[%s7 + $0x10] sm:$0x3f]
  %v308 = vadd.f32 %v292, %v305
  %v309 = vadd.f32 %v295, %v306
  %v310 = vadd.f32 %v300, %v307
  %v311 = vadd.f32 %v308, %v116
  %v312 = vadd.f32 %v309, %v119
  %v313 = vadd.f32 %v310, %v124
  %314 = vst.msk [vmem:[%s8] sm:$0xff] %vm154, %v311
  %315 = vst.msk [vmem:[%s8 + $0x8] sm:$0xff] %vm154, %v312
  %vm316 = vcmask 259072
  %317 = vst.msk [vmem:[%s8 + $0x10] sm:$0x3f] %vm316, %v313
  // Predicated region
  $region34: #{ast_adapter_forward.14} parent=0 // pred_check
    _
  $region35: #{ast_adapter_forward.14} parent=0 // pred_check_branch
    %319 = sbr.rel (0) target = $region37
  $region36: #{ast_adapter_forward.14} parent=0 // pred_region
    _
  $region37: #{ast_adapter_forward.14} parent=0 // pred_fallthru
    _
  // Predicated region
  $region38: #{ast_adapter_forward.14} parent=0 // pred_check
    _
  $region39: #{ast_adapter_forward.14} parent=0 // pred_check_branch
    %321 = sbr.rel (0) target = $region41
  $region40: #{ast_adapter_forward.14} parent=0 // pred_region
    _
  $region41: #{ast_adapter_forward.14} parent=0 // pred_fallthru
    _

// kernel: ast_adapter_forward.19
$region0: #{ast_adapter_forward.19}
  #allocation0 [shape = 'u32[]', space=smem, size = 0x4, offset = 0x4, fixed_abs, tag = 'smem constant byte address 0x4 - core index']
  #allocation1 [shape = 'u32[144,128]{1,0:T(1,128)}', space=vmem, size = 0x12000, scoped, tag = 'internal scratch']
  %s0 = inlined_call_operand.vmem [shape: f32[2,32], index: 0, kind: input, shape index: {}]
  %s1 = inlined_call_operand.vmem [shape: f32[1,32], index: 1, kind: input, shape index: {}]
  %s2 = inlined_call_operand.vmem [shape: f32[1,32], index: 2, kind: input, shape index: {}]
  %s3 = inlined_call_operand.vmem [shape: bf16[32,5], index: 3, kind: input, shape index: {}]
  %s4 = inlined_call_operand.vmem [shape: f32[1,5], index: 4, kind: input, shape index: {}]
  %s5 = inlined_call_operand.hbm [shape: f32[2,5], index: 5, kind: output, shape index: {}]
  %s6 = sld [smem:[#allocation0]]
  $region30: #{ast_adapter_forward.19} parent=0
    _
  %s8 = ssub.s32 1, %s6
  %s9 = scalar_select 0, %s8, %s6
  $region1: #{ast_adapter_forward.19} parent=0
    #allocation2 [shape = 'u8[1024]{0}', space=vmem, size = 0x400, scoped, tag = 'output window, operand 0, single buffered']
    #allocation3 [shape = 's32[1]{0}', space=sflag, size = 0x4, scoped, tag = 'scoped memory for ast_adapter_forward.19']
    %10 = vsyncpa [#allocation3], 0
    // Predicated region
    $region2: #{ast_adapter_forward.19} parent=1 // pred_check
      _
    $region3: #{ast_adapter_forward.19} parent=1 // pred_check_branch
      %12 = sbr.rel (0) target = $region5
    $region4: #{ast_adapter_forward.19} parent=1 // pred_region
      _
    $region5: #{ast_adapter_forward.19} parent=1 // pred_fallthru
      _
    // Predicated region
    $region6: #{ast_adapter_forward.19} parent=1 // pred_check
      _
    $region7: #{ast_adapter_forward.19} parent=1 // pred_check_branch
      %14 = sbr.rel (0) target = $region9
    $region8: #{ast_adapter_forward.19} parent=1 // pred_region
      _
    $region9: #{ast_adapter_forward.19} parent=1 // pred_fallthru
      _
    // Predicated region
    $region10: #{ast_adapter_forward.19} parent=1 // pred_check
      _
    $region11: #{ast_adapter_forward.19} parent=1 // pred_check_branch
      %16 = sbr.rel (0) target = $region13
    $region12: #{ast_adapter_forward.19} parent=1 // pred_region
      _
    $region13: #{ast_adapter_forward.19} parent=1 // pred_fallthru
      _
    // Predicated region
    $region14: #{ast_adapter_forward.19} parent=1 // pred_check
      _
    $region15: #{ast_adapter_forward.19} parent=1 // pred_check_branch
      %18 = sbr.rel (0) target = $region17
    $region16: #{ast_adapter_forward.19} parent=1 // pred_region
      _
    $region17: #{ast_adapter_forward.19} parent=1 // pred_fallthru
      _
    // Predicated region
    $region18: #{ast_adapter_forward.19} parent=1 // pred_check
      _
    $region19: #{ast_adapter_forward.19} parent=1 // pred_check_branch
      %20 = sbr.rel (0) target = $region21
    $region20: #{ast_adapter_forward.19} parent=1 // pred_region
      _
    $region21: #{ast_adapter_forward.19} parent=1 // pred_fallthru
      _
    %v22 = vld [vmem:[%s0] sm:$0x3]
    %vm23 = vcmask 254976
    %v24 = vsel %vm23, %v22, 0.0
    %25 = vadd.xlane.f32.xlu0 %v24
    %v26 = vpop.xlane.xlu0 %25
    %v27 = vrcp.pop 32.0
    %v28 = vmul.f32 %v26, %v27
    %v29 = vsub.f32 %v22, %v28
    %v30 = vmul.f32 %v29, %v29
    %v31 = vsel %vm23, %v30, 0.0
    %32 = vadd.xlane.f32.xlu0 %v31
    %v33 = vpop.xlane.xlu0 %32
    %v34 = vmul.f32 %v33, %v27
    %v35 = vadd.f32 %v34, 1e-12
    %v36 = vrsqrt.pop %v35
    %v37 = vmul.f32 %v29, %v36
    %v38 = vld [vmem:[%s1] sm:$0x1]
    %v40 = vlaneseq
    %v41 = vshrl.u32 %v40, 7
    %v42 = vsub.s32 0, %v41
    %v43 = vrot.slane %v38, %v42
    %v45 = vmul.f32 %v37, %v43
    %v46 = vld [vmem:[%s2] sm:$0x1]
    %v48 = vlaneseq
    %v49 = vshrl.u32 %v48, 7
    %v50 = vsub.s32 0, %v49
    %v51 = vrot.slane %v46, %v50
    %v53 = vadd.f32 %v45, %v51
    %v54 = vpack.c.bf16 %v53, %v53
    %v55 = vld [vmem:[%s3] sm:$0xf]
    %v56 = vld [vmem:[%s3 + $0x4] sm:$0xf]
    %v57 = vld [vmem:[%s3 + $0x8] sm:$0xf]
    %v58 = vld [vmem:[%s3 + $0xc] sm:$0xf]
    %v59 = vld [vmem:[%s4] sm:$0x1]
    %v61 = vlaneseq
    %v62 = vshrl.u32 %v61, 7
    %v63 = vsub.s32 0, %v62
    %v64 = vrot.slane %v59, %v63
    %v70 = vunpack.c.l.b16 %v55
    %v71 = vunpack.c.l.b16 %v56
    %v72 = vunpack.c.l.b16 %v57
    %v73 = vunpack.c.l.b16 %v58
    %v74 = vpack.c.b16 %v71, %v70
    %v75 = vpack.c.b16 %v73, %v72
    %vm78 = vcmask 261120
    %v80 = vsel %vm78, %v54, 0
    %82 = vmatprep.subr.bf16.mxu0 0
    %83 = vmatpush1.bf16.msra.mxu0 %v74
    %84 = vmatprep.subr.bf16.mxu0 0
    %85 = vmatpush1.bf16.msra.mxu0 %v75
    %86 = vmatprep.subr.bf16.mxu0 0
    %87 = vmatpush1.bf16.msra.mxu0 0
    %88 = vmatprep.subr.bf16.mxu0 0
    %89 = vmatpush1.bf16.msra.mxu0 0
    %90 = vmatprep.subr.bf16.mxu0 0
    %91 = vmatpush1.bf16.msra.mxu0 0
    %92 = vmatprep.subr.bf16.mxu0 0
    %93 = vmatpush1.bf16.msra.mxu0 0
    %94 = vmatprep.subr.bf16.mxu0 0
    %95 = vmatpush1.bf16.msra.mxu0 0
    %96 = vmatprep.subr.bf16.mxu0 0
    %97 = vmatpush1.bf16.msra.mxu0 0
    %98 = vmatprep.subr.bf16.mxu0 0
    %99 = vmatpush1.bf16.msra.mxu0 0
    %100 = vmatprep.subr.bf16.mxu0 0
    %101 = vmatpush1.bf16.msra.mxu0 0
    %102 = vmatprep.subr.bf16.mxu0 0
    %103 = vmatpush1.bf16.msra.mxu0 0
    %104 = vmatprep.subr.bf16.mxu0 0
    %105 = vmatpush1.bf16.msra.mxu0 0
    %106 = vmatprep.subr.bf16.mxu0 0
    %107 = vmatpush1.bf16.msra.mxu0 0
    %108 = vmatprep.subr.bf16.mxu0 0
    %109 = vmatpush1.bf16.msra.mxu0 0
    %110 = vmatprep.subr.bf16.mxu0 0
    %111 = vmatpush1.bf16.msra.mxu0 0
    %112 = vmatprep.subr.bf16.mxu0 0
    %113 = vmatpush1.bf16.msra.mxu0 0
    %114 = vmatprep.mubr.bf16.mxu0 0
    %115 = vmatmul.mubr.bf16.gmra.mrb[0].mxu0 %v80
    %v116 = vpop.f32.mrb[0].mxu0
    %v117 = vadd.f32 %v64, %v116
    %v118 = vpop.f32.mrb[0].mxu0
    %v119 = vpop.f32.mrb[0].mxu0
    %v120 = vpop.f32.mrb[0].mxu0
    %121 = vdwg.mxu0
    %vm122 = vcmask 33792
    %123 = vst.msk [vmem:[#allocation2] sm:$0x3] %vm122, %v117
    // Predicated region
    $region22: #{ast_adapter_forward.19} parent=1 // pred_check
      _
    $region23: #{ast_adapter_forward.19} parent=1 // pred_check_branch
      %125 = sbr.rel (0) target = $region25
    $region24: #{ast_adapter_forward.19} parent=1 // pred_region
      %s127 = ssub.s32 32, 32
      %128 = vsyncadd [#allocation3], %s127
      %s130 = sshll.u32 [#allocation2], 4
      %s131 = int_to_ptr.vmem [resolvable:$true] %s130
      %133 = dma.vmem_to_hbm [thread:$0]  %s131, 32, %s5, [#allocation3]
    $region25: #{ast_adapter_forward.19} parent=1 // pred_fallthru
      _
    // Predicated region
    $region26: #{ast_adapter_forward.19} parent=1 // pred_check
      _
    $region27: #{ast_adapter_forward.19} parent=1 // pred_check_branch
      %135 = sbr.rel (0) target = $region29
    $region28: #{ast_adapter_forward.19} parent=1 // pred_region
      %136 = dma.done [#allocation3], 32
    $region29: #{ast_adapter_forward.19} parent=1 // pred_fallthru
      _
    %137 = vsyncpa [#allocation3], 1

</llo_original>
